<compile_context>
chip_gen: v6e
topology: v6e:2x2x1
jax: 0.10.0
libtpu: 0.0.40
codegen_flags: <defaults>
</compile_context>

<pallas_src>
import functools
import math

import jax
import jax.numpy as jnp
import numpy as np
from jax.experimental import pallas as pl
from jax.experimental.pallas import tpu as pltpu


def _round_up(x, m):
    return ((x + m - 1) // m) * m


def _tpu_vmem_capacity_bytes():
    try:
        return int(pltpu.get_tpu_info().vmem_capacity_bytes)
    except Exception:
        return 128 * 1024 * 1024


def _pick_head_group(n_heads, head_dim, lane_cap):
    """Smallest divisor of n_heads whose packed minor dim (Hb*D) is a multiple of 128
    lanes and fits under lane_cap; falls back to a 128-multiple above the cap, then to
    all heads (a block equal to the full minor dim is always a legal BlockSpec)."""
    over_cap = None
    for d in range(1, n_heads + 1):
        if n_heads % d:
            continue
        hbd = d * head_dim
        if hbd % 128 == 0:
            if hbd <= lane_cap:
                return d
            if over_cap is None:
                over_cap = d
    return over_cap if over_cap is not None else n_heads


def _sample_top_indices(queries, keys, factor, sample_key):
    """Random key sampling, sparsity measure M and top-u query selection (JAX glue).

    queries/keys: (B, L, H, D).  Returns m_top: (B, H, u) int32.
    """
    # TODO(synk): torch.randint's RNG stream / torch.topk are reproduced with JAX
    # equivalents (jax.random.randint / lax.top_k); this stage also still materializes
    # a (B, L_Q, U_part, H, D) gathered-key tensor (just like the PyTorch code).
    B, L_Q, H, D = queries.shape
    _, L_K, _, _ = keys.shape
    U_part = min(int(factor * math.ceil(math.log(L_K))), L_K)
    u = min(int(factor * math.ceil(math.log(L_Q))), L_Q)
    idx_sample = jax.random.randint(sample_key, (L_Q, U_part), 0, L_K)
    k_sample = keys[:, idx_sample, :, :]                        # (B, L_Q, U_part, H, D)
    qk_sample = jnp.einsum('bqhd,bqshd->bhqs', queries, k_sample)
    M = qk_sample.max(-1) - qk_sample.sum(-1) / L_K
    _, m_top = jax.lax.top_k(M, u)
    return m_top.astype(jnp.int32)


def _prob_attn_kernel(last_ref, qr_ref, k_ref, v_ref, idx_ref, o_ref,
                      m_scr, l_scr, acc_scr, *,
                      mask_flag, heads, head_dim, hg, l_k, k_tile, mask_key_pad):
    # Refs for grid step (b, g, kt):
    #   last_ref: (B*Hg,)   SMEM   last K tile any selected query of (b, g) attends to
    #   qr_ref  : (1, 1, u_pad, Hb*D)  selected queries, pre-scaled, head-packed lanes
    #   k_ref   : (1, k_tile, Hb*D)    key tile (lane slice g of the (B, L, H*D) view)
    #   v_ref   : (1, k_tile, Hb*D)    value tile
    #   idx_ref : (1, 1, u_pad, Hb)    selected query positions (causal-mask threshold)
    #   o_ref   : (1, 1, u_pad, Hb*D)  attention rows, written on the last K tile
    b = pl.program_id(0)
    g = pl.program_id(1)
    kt = pl.program_id(2)

    @pl.when(kt == 0)
    def _init():
        m_scr[...] = jnp.full(m_scr.shape, -jnp.inf, m_scr.dtype)
        l_scr[...] = jnp.zeros(l_scr.shape, l_scr.dtype)
        acc_scr[...] = jnp.zeros(acc_scr.shape, acc_scr.dtype)

    u_pad = qr_ref.shape[2]

    def _tile():
        col = kt * k_tile + jax.lax.broadcasted_iota(jnp.int32, (u_pad, k_tile), 1)
        if mask_key_pad:
            kvalid = (kt * k_tile
                      + jax.lax.broadcasted_iota(jnp.int32, (k_tile, 1), 0)) < l_k
        for h in range(heads):
            lo = h * head_dim
            hi = lo + head_dim
            q_h = qr_ref[0, 0, :, lo:hi]                               # (u_pad, D)
            k_h = k_ref[0, :, lo:hi]                                   # (Tk, D)
            v_h = v_ref[0, :, lo:hi]                                   # (Tk, D)
            if mask_key_pad:
                # Ragged last tile: zero out-of-range V rows (their score columns are
                # masked to -inf below, but 0 * garbage must not produce NaN in acc).
                v_h = jnp.where(kvalid, v_h, jnp.zeros((), v_h.dtype))

            s = jax.lax.dot_general(q_h, k_h, (((1,), (1,)), ((), ())),
                                    preferred_element_type=jnp.float32)  # (u_pad, Tk)
            if mask_flag:
                # ProbMask: column j masked for selected query index i iff j > i.
                idx_h = idx_ref[0, 0, :, h:h + 1]                      # (u_pad, 1)
                s = jnp.where(col > idx_h, -jnp.inf, s)
            if mask_key_pad:
                s = jnp.where(col >= l_k, -jnp.inf, s)

            m_prev = m_scr[:, h:h + 1]
            m_new = jnp.maximum(m_prev, jnp.max(s, axis=-1, keepdims=True))
            alpha = jnp.exp(m_prev - m_new)
            p = jnp.exp(s - m_new)
            l_scr[:, h:h + 1] = alpha * l_scr[:, h:h + 1] + jnp.sum(p, -1, keepdims=True)
            acc_scr[:, lo:hi] = alpha * acc_scr[:, lo:hi] + jax.lax.dot_general(
                p.astype(v_h.dtype), v_h, (((1,), (0,)), ((), ())),
                preferred_element_type=jnp.float32)
            m_scr[:, h:h + 1] = m_new

    # Tile 0 always runs (selected indices are >= 0, so column 0 is always live there
    # and the accumulators become finite on the first tile); tiles past the largest
    # selected index of this head group are skipped entirely (their K/V DMAs were
    # already suppressed by the clamped index_map).
    pl.when(kt <= last_ref[b * hg + g])(_tile)

    @pl.when(kt == pl.num_programs(2) - 1)
    def _finalize():
        pieces = []
        for h in range(heads):
            lo = h * head_dim
            hi = lo + head_dim
            inv_l = pl.reciprocal(l_scr[:, h:h + 1], approx=True)       # EUP slot
            pieces.append(acc_scr[:, lo:hi] * inv_l)
        out = pieces[0] if len(pieces) == 1 else jnp.concatenate(pieces, axis=-1)
        o_ref[0, 0] = out.astype(o_ref.dtype)                           # lane-dense store


def prob_attention(queries, keys, values, attn_mask=None, *, factor=5, scale=None,
                   mask_flag=True, sample_key=None, k_tile_target=None, lane_cap=None):
    """ProbAttention forward.  queries/keys/values: (B, L, H, D).

    Returns (context, None) with context shaped (B, H, L_Q, D), matching the PyTorch
    module with output_attention=False (the module's nn.Dropout is never applied in its
    forward, so none is applied here either).

    The kernel streams K/V in the input dtype: pass bf16 tensors on v6e/v7x to halve
    the dominant HBM stream (each K/V element is read exactly once, so a wrapper-side
    f32->bf16 cast would add HBM traffic rather than remove it).
    """
    del attn_mask  # the ProbMask is rebuilt from the selected indices, as in PyTorch
    if sample_key is None:
        sample_key = jax.random.PRNGKey(0)
    B, L_Q, H, D = queries.shape
    _, L_K, _, _ = keys.shape
    _, L_V, _, _ = values.shape
    assert L_K == L_V
    if mask_flag:
        assert L_Q == L_V, "mask_flag=True requires L_Q == L_V (cumsum initial context)"

    # ---- generation-aware sizing (v7x: 64 MiB VMEM per TensorCore) ----
    vmem_cap = _tpu_vmem_capacity_bytes()
    small_vmem = vmem_cap < 100 * 1024 * 1024
    if lane_cap is None:
        lane_cap = 256 if small_vmem else 512
    if k_tile_target is None:
        k_tile_target = 1024 if small_vmem else 2048
    vmem_limit = min(48 * 1024 * 1024,
                     max(vmem_cap - 8 * 1024 * 1024, 16 * 1024 * 1024))

    Hb = _pick_head_group(H, D, lane_cap)   # heads packed into the lane axis
    Hg = H // Hb
    HbD = Hb * D

    u = min(int(factor * math.ceil(math.log(L_Q))), L_Q)
    u_pad = _round_up(u, 8)
    scale_val = float(scale) if scale is not None else 1.0 / math.sqrt(D)

    # ---- sampling glue (outside the kernel): top-u query indices per (b, h) ----
    m_top = _sample_top_indices(queries, keys, factor, sample_key)          # (B, H, u)
    # Padded rows gather query row 0 with mask threshold 0 (finite softmax); their
    # kernel output rows are dropped before the scatter.
    m_top_pad = jnp.pad(m_top, ((0, 0), (0, 0), (0, u_pad - u)))

    # ---- selected queries: tiny gather + scale fold + head-group packing ----
    bidx = jnp.arange(B)[:, None, None]
    hidx = jnp.arange(H)[None, :, None]
    q_reduce = queries[bidx, m_top_pad, hidx]                               # (B,H,u_pad,D)
    qr = (q_reduce.astype(jnp.float32) * scale_val).astype(queries.dtype)
    qr_p = (qr.reshape(B, Hg, Hb, u_pad, D)
              .transpose(0, 1, 3, 2, 4)
              .reshape(B, Hg, u_pad, HbD))
    idx_cols = (m_top_pad.reshape(B, Hg, Hb, u_pad)
                         .transpose(0, 1, 3, 2)
                         .astype(jnp.int32))                                # (B,Hg,u_pad,Hb)

    # ---- K/V: zero-copy lane-packed view, streamed over the third grid axis ----
    k_flat = keys.reshape(B, L_K, H * D)        # no transpose / pack / pad copies
    v_flat = values.reshape(B, L_V, H * D)
    k_tile = max(8, min(int(k_tile_target), _round_up(L_K, 8)))
    n_kt = pl.cdiv(L_K, k_tile)
    mask_key_pad = (n_kt * k_tile != L_K)

    # Last K tile each (b, head-group) can attend to (scalar prefetch: clamps the K/V
    # DMA block index and gates the per-tile compute).
    if mask_flag:
        last_tile = m_top.max(axis=2).reshape(B, Hg, Hb).max(axis=2) // k_tile
    else:
        last_tile = jnp.full((B, Hg), n_kt - 1, jnp.int32)
    last_tile = last_tile.reshape(B * Hg).astype(jnp.int32)

    kernel = functools.partial(
        _prob_attn_kernel, mask_flag=mask_flag, heads=Hb, head_dim=D, hg=Hg,
        l_k=L_K, k_tile=k_tile, mask_key_pad=mask_key_pad)

    def kv_map(b, g, t, lt):
        return (b, jnp.minimum(t, lt[b * Hg + g]), g)

    out_p = pl.pallas_call(
        kernel,
        out_shape=jax.ShapeDtypeStruct((B, Hg, u_pad, HbD), values.dtype),
        grid_spec=pltpu.PrefetchScalarGridSpec(
            num_scalar_prefetch=1,
            grid=(B, Hg, n_kt),
            in_specs=[
                pl.BlockSpec((1, 1, u_pad, HbD), lambda b, g, t, lt: (b, g, 0, 0)),
                pl.BlockSpec((1, k_tile, HbD), kv_map),
                pl.BlockSpec((1, k_tile, HbD), kv_map),
                pl.BlockSpec((1, 1, u_pad, Hb), lambda b, g, t, lt: (b, g, 0, 0)),
            ],
            out_specs=pl.BlockSpec((1, 1, u_pad, HbD), lambda b, g, t, lt: (b, g, 0, 0)),
            scratch_shapes=[
                pltpu.VMEM((u_pad, Hb), jnp.float32),      # running max
                pltpu.VMEM((u_pad, Hb), jnp.float32),      # running denominator
                pltpu.VMEM((u_pad, HbD), jnp.float32),     # running numerator
            ],
        ),
        compiler_params=pltpu.CompilerParams(
            dimension_semantics=("parallel", "parallel", "arbitrary"),
            vmem_limit_bytes=vmem_limit,
        ),
    )(last_tile, qr_p, k_flat, v_flat, idx_cols)

    # ---- unpack the u attention rows and scatter them into the initial context ----
    attn_rows = (out_p.reshape(B, Hg, u_pad, Hb, D)
                      .transpose(0, 1, 3, 2, 4)
                      .reshape(B, H, u_pad, D)[:, :, :u, :])
    if mask_flag:
        ctx = jnp.cumsum(values.astype(jnp.float32), axis=1)                 # f32 accum
        ctx = jnp.transpose(ctx, (0, 2, 1, 3)).astype(values.dtype)          # (B,H,L,D)
    else:
        vmean = jnp.mean(values.astype(jnp.float32), axis=1)                 # (B,H,D)
        ctx = jnp.broadcast_to(vmean[:, :, None, :],
                               (B, H, L_Q, D)).astype(values.dtype)
    context = ctx.at[bidx, hidx, m_top, :].set(attn_rows.astype(values.dtype))
    return context, None


def _reference(queries, keys, values, sample_key, *, factor=5, scale=None, mask_flag=True):
    """Pure-JAX mirror of the PyTorch forward (per-head layout)."""
    B, L_Q, H, D = queries.shape
    _, L_K, _, _ = keys.shape
    q = jnp.transpose(queries, (0, 2, 1, 3))
    k = jnp.transpose(keys, (0, 2, 1, 3))
    v = jnp.transpose(values, (0, 2, 1, 3))
    m_top = _sample_top_indices(queries, keys, factor, sample_key)
    q_reduce = jnp.take_along_axis(q, m_top[..., None], axis=2)
    sc = scale if scale is not None else 1.0 / math.sqrt(D)
    scores = jnp.einsum('bhud,bhkd->bhuk', q_reduce, k) * sc
    if mask_flag:
        col = jnp.arange(L_K)[None, None, None, :]
        scores = jnp.where(col > m_top[..., None], -jnp.inf, scores)
        ctx = jnp.cumsum(v.astype(jnp.float32), axis=2).astype(v.dtype)
    else:
        ctx = jnp.broadcast_to(v.astype(jnp.float32).mean(axis=2, keepdims=True),
                               (B, H, L_Q, D)).astype(v.dtype)
    attn = jax.nn.softmax(scores, axis=-1)
    out = jnp.einsum('bhuk,bhkd->bhud', attn, v)
    bidx = jnp.arange(B)[:, None, None]
    hidx = jnp.arange(H)[None, :, None]
    return ctx.at[bidx, hidx, m_top, :].set(out.astype(ctx.dtype))


if __name__ == "__main__":
    key = jax.random.PRNGKey(0)
    kq, kk, kv, ks = jax.random.split(key, 4)

    B, L, H, D = 2, 16, 4, 32       # L_Q == L_K == L_V (required for mask_flag=True)
    queries = jax.random.normal(kq, (B, L, H, D), dtype=jnp.float32)
    keys = jax.random.normal(kk, (B, L, H, D), dtype=jnp.float32)
    values = jax.random.normal(kv, (B, L, H, D), dtype=jnp.float32)

    # masked (default) path
    ctx, attn = prob_attention(queries, keys, values, None, sample_key=ks)
    ctx = jax.block_until_ready(ctx)
    assert attn is None
    ref = jax.block_until_ready(_reference(queries, keys, values, ks, mask_flag=True))
    np.testing.assert_allclose(np.asarray(ctx), np.asarray(ref), rtol=1e-2, atol=1e-2)

    # unmasked path (mean initial context)
    ctx_nm, _ = prob_attention(queries, keys, values, None, sample_key=ks, mask_flag=False)
    ref_nm = _reference(queries, keys, values, ks, mask_flag=False)
    np.testing.assert_allclose(np.asarray(jax.block_until_ready(ctx_nm)),
                               np.asarray(ref_nm), rtol=1e-2, atol=1e-2)

    # bf16 inputs: K/V stream runs in bf16 end to end (recommended on v6e/v7x),
    # with f32 softmax / accumulation inside the kernel.
    qb = queries.astype(jnp.bfloat16)
    kb = keys.astype(jnp.bfloat16)
    vb = values.astype(jnp.bfloat16)
    ctx_bf, _ = prob_attention(qb, kb, vb, None, sample_key=ks)
    ctx_bf = jax.block_until_ready(ctx_bf)
    ref_bf = jax.block_until_ready(_reference(qb, kb, vb, ks, mask_flag=True))
    np.testing.assert_allclose(np.asarray(ctx_bf.astype(jnp.float32)),
                               np.asarray(ref_bf.astype(jnp.float32)),
                               rtol=5e-2, atol=0.2)

    print("KERNEL_OK")
</pallas_src>

<mosaic_0001>
module attributes {stable_mosaic.version = 11 : i64} {
  func.func @_prob_attn_kernel(%arg0: i32, %arg1: i32, %arg2: i32, %arg3: memref<2xi32, #tpu.memory_space<smem>>, %arg4: memref<1x1x16x128xf32, #tpu.memory_space<vmem>>, %arg5: memref<1x16x128xf32, #tpu.memory_space<vmem>>, %arg6: memref<1x16x128xf32, #tpu.memory_space<vmem>>, %arg7: memref<1x1x16x4xi32, #tpu.memory_space<vmem>>, %arg8: memref<1x1x16x128xf32, #tpu.memory_space<vmem>>, %arg9: memref<16x4xf32, #tpu.memory_space<vmem>>, %arg10: memref<16x4xf32, #tpu.memory_space<vmem>>, %arg11: memref<16x128xf32, #tpu.memory_space<vmem>>) attributes {dimension_semantics = [#tpu.dimension_semantics<parallel>, #tpu.dimension_semantics<parallel>, #tpu.dimension_semantics<arbitrary>], iteration_bounds = array<i64: 2, 1, 1>, scalar_prefetch = 1 : i64, scratch_operands = 3 : i64, tpu.core_type = #tpu.core_type<tc>, window_params = [{transform_indices = @transform_0, window_bounds = array<i64: 1, 1, 16, 128>}, {transform_indices = @transform_1, window_bounds = array<i64: 1, 16, 128>}, {transform_indices = @transform_2, window_bounds = array<i64: 1, 16, 128>}, {transform_indices = @transform_3, window_bounds = array<i64: 1, 1, 16, 4>}, {transform_indices = @transform_4, window_bounds = array<i64: 1, 1, 16, 128>}]} {
    %c0_i32 = arith.constant 0 : i32
    %0 = arith.cmpi eq, %arg2, %c0_i32 : i32
    %1 = arith.extui %0 : i1 to i32
    %c0_i32_0 = arith.constant 0 : i32
    %2 = arith.cmpi ne, %1, %c0_i32_0 : i32
    scf.if %2 {
      %cst = arith.constant 0xFF800000 : f32
      %13 = vector.broadcast %cst : f32 to vector<16x4xf32>
      %c0 = arith.constant 0 : index
      %c0_4 = arith.constant 0 : index
      %14 = vector.load %arg9[%c0, %c0_4] : memref<16x4xf32, #tpu.memory_space<vmem>>, vector<16x4xf32>
      tpu.vector_store %arg9[%c0, %c0_4], %13 {strides = array<i32>} : memref<16x4xf32, #tpu.memory_space<vmem>>, vector<16x4xf32>,
      %cst_5 = arith.constant 0.000000e+00 : f32
      %15 = vector.broadcast %cst_5 : f32 to vector<16x4xf32>
      %c0_6 = arith.constant 0 : index
      %c0_7 = arith.constant 0 : index
      %16 = vector.load %arg10[%c0_6, %c0_7] : memref<16x4xf32, #tpu.memory_space<vmem>>, vector<16x4xf32>
      tpu.vector_store %arg10[%c0_6, %c0_7], %15 {strides = array<i32>} : memref<16x4xf32, #tpu.memory_space<vmem>>, vector<16x4xf32>,
      %cst_8 = arith.constant 0.000000e+00 : f32
      %17 = vector.broadcast %cst_8 : f32 to vector<16x128xf32>
      %c0_9 = arith.constant 0 : index
      %c0_10 = arith.constant 0 : index
      %18 = vector.load %arg11[%c0_9, %c0_10] : memref<16x128xf32, #tpu.memory_space<vmem>>, vector<16x128xf32>
      tpu.vector_store %arg11[%c0_9, %c0_10], %17 {strides = array<i32>} : memref<16x128xf32, #tpu.memory_space<vmem>>, vector<16x128xf32>,
    } else {
    }
    %c1_i32 = arith.constant 1 : i32
    %3 = arith.muli %arg0, %c1_i32 : i32
    %4 = arith.addi %3, %arg1 : i32
    %5 = arith.index_cast %4 : i32 to index
    %6 = memref.load %arg3[%5] : memref<2xi32, #tpu.memory_space<smem>>
    %7 = arith.cmpi sle, %arg2, %6 : i32
    %8 = arith.extui %7 : i1 to i32
    %c0_i32_1 = arith.constant 0 : i32
    %9 = arith.cmpi ne, %8, %c0_i32_1 : i32
    scf.if %9 {
      %c16_i32 = arith.constant 16 : i32
      %13 = arith.muli %arg2, %c16_i32 : i32
      %14 = tpu.iota {dimensions = array<i32: 1>} : vector<16x16xi32>
      %15 = vector.broadcast %13 : i32 to vector<16x16xi32>
      %16 = arith.addi %15, %14 : vector<16x16xi32>
      %c0 = arith.constant 0 : index
      %c0_4 = arith.constant 0 : index
      %c0_5 = arith.constant 0 : index
      %c0_6 = arith.constant 0 : index
      %17 = vector.load %arg4[%c0, %c0_4, %c0_5, %c0_6] : memref<1x1x16x128xf32, #tpu.memory_space<vmem>>, vector<1x1x16x32xf32>
      %18 = vector.shape_cast %17 : vector<1x1x16x32xf32> to vector<16x32xf32>
      %c0_7 = arith.constant 0 : index
      %c0_8 = arith.constant 0 : index
      %c0_9 = arith.constant 0 : index
      %19 = vector.load %arg5[%c0_7, %c0_8, %c0_9] : memref<1x16x128xf32, #tpu.memory_space<vmem>>, vector<1x16x32xf32>
      %20 = vector.shape_cast %19 : vector<1x16x32xf32> to vector<16x32xf32>
      %c0_10 = arith.constant 0 : index
      %c0_11 = arith.constant 0 : index
      %c0_12 = arith.constant 0 : index
      %21 = vector.load %arg6[%c0_10, %c0_11, %c0_12] : memref<1x16x128xf32, #tpu.memory_space<vmem>>, vector<1x16x32xf32>
      %22 = vector.shape_cast %21 : vector<1x16x32xf32> to vector<16x32xf32>
      %cst = arith.constant dense<0.000000e+00> : vector<16x16xf32>
      %23 = tpu.matmul %18, %20, %cst {dimension_numbers = #tpu.dot_dimension_numbers<[1], [1], [0], [0], [0, 0, 1, 0], [], []>} : vector<16x32xf32>, vector<16x32xf32>, vector<16x16xf32> -> vector<16x16xf32>
      %c0_13 = arith.constant 0 : index
      %c0_14 = arith.constant 0 : index
      %c0_15 = arith.constant 0 : index
      %c0_16 = arith.constant 0 : index
      %24 = vector.load %arg7[%c0_13, %c0_14, %c0_15, %c0_16] : memref<1x1x16x4xi32, #tpu.memory_space<vmem>>, vector<1x1x16x1xi32>
      %25 = vector.shape_cast %24 : vector<1x1x16x1xi32> to vector<16x1xi32>
      %26 = vector.broadcast %25 : vector<16x1xi32> to vector<16x16xi32>
      %27 = arith.cmpi sgt, %16, %26 : vector<16x16xi32>
      %cst_17 = arith.constant 0xFF800000 : f32
      %28 = vector.broadcast %cst_17 : f32 to vector<16x16xf32>
      %29 = arith.select %27, %28, %23 : vector<16x16xi1>, vector<16x16xf32>
      %c0_18 = arith.constant 0 : index
      %c0_19 = arith.constant 0 : index
      %30 = vector.load %arg9[%c0_18, %c0_19] : memref<16x4xf32, #tpu.memory_space<vmem>>, vector<16x1xf32>
      %cst_20 = arith.constant dense<0xFF800000> : vector<16xf32>
      %31 = vector.multi_reduction <maximumf>, %29, %cst_20 [1] : vector<16x16xf32> to vector<16xf32>
      %32 = vector.shape_cast %31 : vector<16xf32> to vector<16x1xf32>
      %33 = arith.maximumf %30, %32 : vector<16x1xf32>
      %34 = arith.subf %30, %33 : vector<16x1xf32>
      %35 = math.exp %34 : vector<16x1xf32>
      %36 = vector.broadcast %33 : vector<16x1xf32> to vector<16x16xf32>
      %37 = arith.subf %29, %36 : vector<16x16xf32>
      %38 = math.exp %37 : vector<16x16xf32>
      %c0_21 = arith.constant 0 : index
      %c0_22 = arith.constant 0 : index
      %39 = vector.load %arg10[%c0_21, %c0_22] : memref<16x4xf32, #tpu.memory_space<vmem>>, vector<16x1xf32>
      %40 = arith.mulf %35, %39 : vector<16x1xf32>
      %cst_23 = arith.constant dense<0.000000e+00> : vector<16xf32>
      %41 = vector.multi_reduction <add>, %38, %cst_23 [1] : vector<16x16xf32> to vector<16xf32>
      %42 = vector.shape_cast %41 : vector<16xf32> to vector<16x1xf32>
      %43 = arith.addf %40, %42 : vector<16x1xf32>
      %c0_24 = arith.constant 0 : index
      %c0_25 = arith.constant 0 : index
      %44 = vector.load %arg10[%c0_24, %c0_25] : memref<16x4xf32, #tpu.memory_space<vmem>>, vector<16x1xf32>
      tpu.vector_store %arg10[%c0_24, %c0_25], %43 {strides = array<i32>} : memref<16x4xf32, #tpu.memory_space<vmem>>, vector<16x1xf32>,
      %c0_26 = arith.constant 0 : index
      %c0_27 = arith.constant 0 : index
      %45 = vector.load %arg11[%c0_26, %c0_27] : memref<16x128xf32, #tpu.memory_space<vmem>>, vector<16x32xf32>
      %46 = vector.broadcast %35 : vector<16x1xf32> to vector<16x32xf32>
      %47 = arith.mulf %46, %45 : vector<16x32xf32>
      %cst_28 = arith.constant dense<0.000000e+00> : vector<16x32xf32>
      %48 = tpu.matmul %38, %22, %cst_28 {dimension_numbers = #tpu.dot_dimension_numbers<[1], [0], [0], [1], [0, 0, 1, 1], [], []>} : vector<16x16xf32>, vector<16x32xf32>, vector<16x32xf32> -> vector<16x32xf32>
      %49 = arith.addf %47, %48 : vector<16x32xf32>
      %c0_29 = arith.constant 0 : index
      %c0_30 = arith.constant 0 : index
      %50 = vector.load %arg11[%c0_29, %c0_30] : memref<16x128xf32, #tpu.memory_space<vmem>>, vector<16x32xf32>
      tpu.vector_store %arg11[%c0_29, %c0_30], %49 {strides = array<i32>} : memref<16x128xf32, #tpu.memory_space<vmem>>, vector<16x32xf32>,
      %c0_31 = arith.constant 0 : index
      %c0_32 = arith.constant 0 : index
      %51 = vector.load %arg9[%c0_31, %c0_32] : memref<16x4xf32, #tpu.memory_space<vmem>>, vector<16x1xf32>
      tpu.vector_store %arg9[%c0_31, %c0_32], %33 {strides = array<i32>} : memref<16x4xf32, #tpu.memory_space<vmem>>, vector<16x1xf32>,
      %c0_33 = arith.constant 0 : index
      %c0_34 = arith.constant 0 : index
      %c0_35 = arith.constant 0 : index
      %c32 = arith.constant 32 : index
      %52 = vector.load %arg4[%c0_33, %c0_34, %c0_35, %c32] : memref<1x1x16x128xf32, #tpu.memory_space<vmem>>, vector<1x1x16x32xf32>
      %53 = vector.shape_cast %52 : vector<1x1x16x32xf32> to vector<16x32xf32>
      %c0_36 = arith.constant 0 : index
      %c0_37 = arith.constant 0 : index
      %c32_38 = arith.constant 32 : index
      %54 = vector.load %arg5[%c0_36, %c0_37, %c32_38] : memref<1x16x128xf32, #tpu.memory_space<vmem>>, vector<1x16x32xf32>
      %55 = vector.shape_cast %54 : vector<1x16x32xf32> to vector<16x32xf32>
      %c0_39 = arith.constant 0 : index
      %c0_40 = arith.constant 0 : index
      %c32_41 = arith.constant 32 : index
      %56 = vector.load %arg6[%c0_39, %c0_40, %c32_41] : memref<1x16x128xf32, #tpu.memory_space<vmem>>, vector<1x16x32xf32>
      %57 = vector.shape_cast %56 : vector<1x16x32xf32> to vector<16x32xf32>
      %cst_42 = arith.constant dense<0.000000e+00> : vector<16x16xf32>
      %58 = tpu.matmul %53, %55, %cst_42 {dimension_numbers = #tpu.dot_dimension_numbers<[1], [1], [0], [0], [0, 0, 1, 0], [], []>} : vector<16x32xf32>, vector<16x32xf32>, vector<16x16xf32> -> vector<16x16xf32>
      %c0_43 = arith.constant 0 : index
      %c0_44 = arith.constant 0 : index
      %c0_45 = arith.constant 0 : index
      %c1 = arith.constant 1 : index
      %59 = vector.load %arg7[%c0_43, %c0_44, %c0_45, %c1] : memref<1x1x16x4xi32, #tpu.memory_space<vmem>>, vector<1x1x16x1xi32>
      %60 = vector.shape_cast %59 : vector<1x1x16x1xi32> to vector<16x1xi32>
      %61 = vector.broadcast %60 : vector<16x1xi32> to vector<16x16xi32>
      %62 = arith.cmpi sgt, %16, %61 : vector<16x16xi32>
      %cst_46 = arith.constant 0xFF800000 : f32
      %63 = vector.broadcast %cst_46 : f32 to vector<16x16xf32>
      %64 = arith.select %62, %63, %58 : vector<16x16xi1>, vector<16x16xf32>
      %c0_47 = arith.constant 0 : index
      %c1_48 = arith.constant 1 : index
      %65 = vector.load %arg9[%c0_47, %c1_48] : memref<16x4xf32, #tpu.memory_space<vmem>>, vector<16x1xf32>
      %cst_49 = arith.constant dense<0xFF800000> : vector<16xf32>
      %66 = vector.multi_reduction <maximumf>, %64, %cst_49 [1] : vector<16x16xf32> to vector<16xf32>
      %67 = vector.shape_cast %66 : vector<16xf32> to vector<16x1xf32>
      %68 = arith.maximumf %65, %67 : vector<16x1xf32>
      %69 = arith.subf %65, %68 : vector<16x1xf32>
      %70 = math.exp %69 : vector<16x1xf32>
      %71 = vector.broadcast %68 : vector<16x1xf32> to vector<16x16xf32>
      %72 = arith.subf %64, %71 : vector<16x16xf32>
      %73 = math.exp %72 : vector<16x16xf32>
      %c0_50 = arith.constant 0 : index
      %c1_51 = arith.constant 1 : index
      %74 = vector.load %arg10[%c0_50, %c1_51] : memref<16x4xf32, #tpu.memory_space<vmem>>, vector<16x1xf32>
      %75 = arith.mulf %70, %74 : vector<16x1xf32>
      %cst_52 = arith.constant dense<0.000000e+00> : vector<16xf32>
      %76 = vector.multi_reduction <add>, %73, %cst_52 [1] : vector<16x16xf32> to vector<16xf32>
      %77 = vector.shape_cast %76 : vector<16xf32> to vector<16x1xf32>
      %78 = arith.addf %75, %77 : vector<16x1xf32>
      %c0_53 = arith.constant 0 : index
      %c1_54 = arith.constant 1 : index
      %79 = vector.load %arg10[%c0_53, %c1_54] : memref<16x4xf32, #tpu.memory_space<vmem>>, vector<16x1xf32>
      tpu.vector_store %arg10[%c0_53, %c1_54], %78 {strides = array<i32>} : memref<16x4xf32, #tpu.memory_space<vmem>>, vector<16x1xf32>,
      %c0_55 = arith.constant 0 : index
      %c32_56 = arith.constant 32 : index
      %80 = vector.load %arg11[%c0_55, %c32_56] : memref<16x128xf32, #tpu.memory_space<vmem>>, vector<16x32xf32>
      %81 = vector.broadcast %70 : vector<16x1xf32> to vector<16x32xf32>
      %82 = arith.mulf %81, %80 : vector<16x32xf32>
      %cst_57 = arith.constant dense<0.000000e+00> : vector<16x32xf32>
      %83 = tpu.matmul %73, %57, %cst_57 {dimension_numbers = #tpu.dot_dimension_numbers<[1], [0], [0], [1], [0, 0, 1, 1], [], []>} : vector<16x16xf32>, vector<16x32xf32>, vector<16x32xf32> -> vector<16x32xf32>
      %84 = arith.addf %82, %83 : vector<16x32xf32>
      %c0_58 = arith.constant 0 : index
      %c32_59 = arith.constant 32 : index
      %85 = vector.load %arg11[%c0_58, %c32_59] : memref<16x128xf32, #tpu.memory_space<vmem>>, vector<16x32xf32>
      tpu.vector_store %arg11[%c0_58, %c32_59], %84 {strides = array<i32>} : memref<16x128xf32, #tpu.memory_space<vmem>>, vector<16x32xf32>,
      %c0_60 = arith.constant 0 : index
      %c1_61 = arith.constant 1 : index
      %86 = vector.load %arg9[%c0_60, %c1_61] : memref<16x4xf32, #tpu.memory_space<vmem>>, vector<16x1xf32>
      tpu.vector_store %arg9[%c0_60, %c1_61], %68 {strides = array<i32>} : memref<16x4xf32, #tpu.memory_space<vmem>>, vector<16x1xf32>,
      %c0_62 = arith.constant 0 : index
      %c0_63 = arith.constant 0 : index
      %c0_64 = arith.constant 0 : index
      %c64 = arith.constant 64 : index
      %87 = vector.load %arg4[%c0_62, %c0_63, %c0_64, %c64] : memref<1x1x16x128xf32, #tpu.memory_space<vmem>>, vector<1x1x16x32xf32>
      %88 = vector.shape_cast %87 : vector<1x1x16x32xf32> to vector<16x32xf32>
      %c0_65 = arith.constant 0 : index
      %c0_66 = arith.constant 0 : index
      %c64_67 = arith.constant 64 : index
      %89 = vector.load %arg5[%c0_65, %c0_66, %c64_67] : memref<1x16x128xf32, #tpu.memory_space<vmem>>, vector<1x16x32xf32>
      %90 = vector.shape_cast %89 : vector<1x16x32xf32> to vector<16x32xf32>
      %c0_68 = arith.constant 0 : index
      %c0_69 = arith.constant 0 : index
      %c64_70 = arith.constant 64 : index
      %91 = vector.load %arg6[%c0_68, %c0_69, %c64_70] : memref<1x16x128xf32, #tpu.memory_space<vmem>>, vector<1x16x32xf32>
      %92 = vector.shape_cast %91 : vector<1x16x32xf32> to vector<16x32xf32>
      %cst_71 = arith.constant dense<0.000000e+00> : vector<16x16xf32>
      %93 = tpu.matmul %88, %90, %cst_71 {dimension_numbers = #tpu.dot_dimension_numbers<[1], [1], [0], [0], [0, 0, 1, 0], [], []>} : vector<16x32xf32>, vector<16x32xf32>, vector<16x16xf32> -> vector<16x16xf32>
      %c0_72 = arith.constant 0 : index
      %c0_73 = arith.constant 0 : index
      %c0_74 = arith.constant 0 : index
      %c2 = arith.constant 2 : index
      %94 = vector.load %arg7[%c0_72, %c0_73, %c0_74, %c2] : memref<1x1x16x4xi32, #tpu.memory_space<vmem>>, vector<1x1x16x1xi32>
      %95 = vector.shape_cast %94 : vector<1x1x16x1xi32> to vector<16x1xi32>
      %96 = vector.broadcast %95 : vector<16x1xi32> to vector<16x16xi32>
      %97 = arith.cmpi sgt, %16, %96 : vector<16x16xi32>
      %cst_75 = arith.constant 0xFF800000 : f32
      %98 = vector.broadcast %cst_75 : f32 to vector<16x16xf32>
      %99 = arith.select %97, %98, %93 : vector<16x16xi1>, vector<16x16xf32>
      %c0_76 = arith.constant 0 : index
      %c2_77 = arith.constant 2 : index
      %100 = vector.load %arg9[%c0_76, %c2_77] : memref<16x4xf32, #tpu.memory_space<vmem>>, vector<16x1xf32>
      %cst_78 = arith.constant dense<0xFF800000> : vector<16xf32>
      %101 = vector.multi_reduction <maximumf>, %99, %cst_78 [1] : vector<16x16xf32> to vector<16xf32>
      %102 = vector.shape_cast %101 : vector<16xf32> to vector<16x1xf32>
      %103 = arith.maximumf %100, %102 : vector<16x1xf32>
      %104 = arith.subf %100, %103 : vector<16x1xf32>
      %105 = math.exp %104 : vector<16x1xf32>
      %106 = vector.broadcast %103 : vector<16x1xf32> to vector<16x16xf32>
      %107 = arith.subf %99, %106 : vector<16x16xf32>
      %108 = math.exp %107 : vector<16x16xf32>
      %c0_79 = arith.constant 0 : index
      %c2_80 = arith.constant 2 : index
      %109 = vector.load %arg10[%c0_79, %c2_80] : memref<16x4xf32, #tpu.memory_space<vmem>>, vector<16x1xf32>
      %110 = arith.mulf %105, %109 : vector<16x1xf32>
      %cst_81 = arith.constant dense<0.000000e+00> : vector<16xf32>
      %111 = vector.multi_reduction <add>, %108, %cst_81 [1] : vector<16x16xf32> to vector<16xf32>
      %112 = vector.shape_cast %111 : vector<16xf32> to vector<16x1xf32>
      %113 = arith.addf %110, %112 : vector<16x1xf32>
      %c0_82 = arith.constant 0 : index
      %c2_83 = arith.constant 2 : index
      %114 = vector.load %arg10[%c0_82, %c2_83] : memref<16x4xf32, #tpu.memory_space<vmem>>, vector<16x1xf32>
      tpu.vector_store %arg10[%c0_82, %c2_83], %113 {strides = array<i32>} : memref<16x4xf32, #tpu.memory_space<vmem>>, vector<16x1xf32>,
      %c0_84 = arith.constant 0 : index
      %c64_85 = arith.constant 64 : index
      %115 = vector.load %arg11[%c0_84, %c64_85] : memref<16x128xf32, #tpu.memory_space<vmem>>, vector<16x32xf32>
      %116 = vector.broadcast %105 : vector<16x1xf32> to vector<16x32xf32>
      %117 = arith.mulf %116, %115 : vector<16x32xf32>
      %cst_86 = arith.constant dense<0.000000e+00> : vector<16x32xf32>
      %118 = tpu.matmul %108, %92, %cst_86 {dimension_numbers = #tpu.dot_dimension_numbers<[1], [0], [0], [1], [0, 0, 1, 1], [], []>} : vector<16x16xf32>, vector<16x32xf32>, vector<16x32xf32> -> vector<16x32xf32>
      %119 = arith.addf %117, %118 : vector<16x32xf32>
      %c0_87 = arith.constant 0 : index
      %c64_88 = arith.constant 64 : index
      %120 = vector.load %arg11[%c0_87, %c64_88] : memref<16x128xf32, #tpu.memory_space<vmem>>, vector<16x32xf32>
      tpu.vector_store %arg11[%c0_87, %c64_88], %119 {strides = array<i32>} : memref<16x128xf32, #tpu.memory_space<vmem>>, vector<16x32xf32>,
      %c0_89 = arith.constant 0 : index
      %c2_90 = arith.constant 2 : index
      %121 = vector.load %arg9[%c0_89, %c2_90] : memref<16x4xf32, #tpu.memory_space<vmem>>, vector<16x1xf32>
      tpu.vector_store %arg9[%c0_89, %c2_90], %103 {strides = array<i32>} : memref<16x4xf32, #tpu.memory_space<vmem>>, vector<16x1xf32>,
      %c0_91 = arith.constant 0 : index
      %c0_92 = arith.constant 0 : index
      %c0_93 = arith.constant 0 : index
      %c96 = arith.constant 96 : index
      %122 = vector.load %arg4[%c0_91, %c0_92, %c0_93, %c96] : memref<1x1x16x128xf32, #tpu.memory_space<vmem>>, vector<1x1x16x32xf32>
      %123 = vector.shape_cast %122 : vector<1x1x16x32xf32> to vector<16x32xf32>
      %c0_94 = arith.constant 0 : index
      %c0_95 = arith.constant 0 : index
      %c96_96 = arith.constant 96 : index
      %124 = vector.load %arg5[%c0_94, %c0_95, %c96_96] : memref<1x16x128xf32, #tpu.memory_space<vmem>>, vector<1x16x32xf32>
      %125 = vector.shape_cast %124 : vector<1x16x32xf32> to vector<16x32xf32>
      %c0_97 = arith.constant 0 : index
      %c0_98 = arith.constant 0 : index
      %c96_99 = arith.constant 96 : index
      %126 = vector.load %arg6[%c0_97, %c0_98, %c96_99] : memref<1x16x128xf32, #tpu.memory_space<vmem>>, vector<1x16x32xf32>
      %127 = vector.shape_cast %126 : vector<1x16x32xf32> to vector<16x32xf32>
      %cst_100 = arith.constant dense<0.000000e+00> : vector<16x16xf32>
      %128 = tpu.matmul %123, %125, %cst_100 {dimension_numbers = #tpu.dot_dimension_numbers<[1], [1], [0], [0], [0, 0, 1, 0], [], []>} : vector<16x32xf32>, vector<16x32xf32>, vector<16x16xf32> -> vector<16x16xf32>
      %c0_101 = arith.constant 0 : index
      %c0_102 = arith.constant 0 : index
      %c0_103 = arith.constant 0 : index
      %c3 = arith.constant 3 : index
      %129 = vector.load %arg7[%c0_101, %c0_102, %c0_103, %c3] : memref<1x1x16x4xi32, #tpu.memory_space<vmem>>, vector<1x1x16x1xi32>
      %130 = vector.shape_cast %129 : vector<1x1x16x1xi32> to vector<16x1xi32>
      %131 = vector.broadcast %130 : vector<16x1xi32> to vector<16x16xi32>
      %132 = arith.cmpi sgt, %16, %131 : vector<16x16xi32>
      %cst_104 = arith.constant 0xFF800000 : f32
      %133 = vector.broadcast %cst_104 : f32 to vector<16x16xf32>
      %134 = arith.select %132, %133, %128 : vector<16x16xi1>, vector<16x16xf32>
      %c0_105 = arith.constant 0 : index
      %c3_106 = arith.constant 3 : index
      %135 = vector.load %arg9[%c0_105, %c3_106] : memref<16x4xf32, #tpu.memory_space<vmem>>, vector<16x1xf32>
      %cst_107 = arith.constant dense<0xFF800000> : vector<16xf32>
      %136 = vector.multi_reduction <maximumf>, %134, %cst_107 [1] : vector<16x16xf32> to vector<16xf32>
      %137 = vector.shape_cast %136 : vector<16xf32> to vector<16x1xf32>
      %138 = arith.maximumf %135, %137 : vector<16x1xf32>
      %139 = arith.subf %135, %138 : vector<16x1xf32>
      %140 = math.exp %139 : vector<16x1xf32>
      %141 = vector.broadcast %138 : vector<16x1xf32> to vector<16x16xf32>
      %142 = arith.subf %134, %141 : vector<16x16xf32>
      %143 = math.exp %142 : vector<16x16xf32>
      %c0_108 = arith.constant 0 : index
      %c3_109 = arith.constant 3 : index
      %144 = vector.load %arg10[%c0_108, %c3_109] : memref<16x4xf32, #tpu.memory_space<vmem>>, vector<16x1xf32>
      %145 = arith.mulf %140, %144 : vector<16x1xf32>
      %cst_110 = arith.constant dense<0.000000e+00> : vector<16xf32>
      %146 = vector.multi_reduction <add>, %143, %cst_110 [1] : vector<16x16xf32> to vector<16xf32>
      %147 = vector.shape_cast %146 : vector<16xf32> to vector<16x1xf32>
      %148 = arith.addf %145, %147 : vector<16x1xf32>
      %c0_111 = arith.constant 0 : index
      %c3_112 = arith.constant 3 : index
      %149 = vector.load %arg10[%c0_111, %c3_112] : memref<16x4xf32, #tpu.memory_space<vmem>>, vector<16x1xf32>
      tpu.vector_store %arg10[%c0_111, %c3_112], %148 {strides = array<i32>} : memref<16x4xf32, #tpu.memory_space<vmem>>, vector<16x1xf32>,
      %c0_113 = arith.constant 0 : index
      %c96_114 = arith.constant 96 : index
      %150 = vector.load %arg11[%c0_113, %c96_114] : memref<16x128xf32, #tpu.memory_space<vmem>>, vector<16x32xf32>
      %151 = vector.broadcast %140 : vector<16x1xf32> to vector<16x32xf32>
      %152 = arith.mulf %151, %150 : vector<16x32xf32>
      %cst_115 = arith.constant dense<0.000000e+00> : vector<16x32xf32>
      %153 = tpu.matmul %143, %127, %cst_115 {dimension_numbers = #tpu.dot_dimension_numbers<[1], [0], [0], [1], [0, 0, 1, 1], [], []>} : vector<16x16xf32>, vector<16x32xf32>, vector<16x32xf32> -> vector<16x32xf32>
      %154 = arith.addf %152, %153 : vector<16x32xf32>
      %c0_116 = arith.constant 0 : index
      %c96_117 = arith.constant 96 : index
      %155 = vector.load %arg11[%c0_116, %c96_117] : memref<16x128xf32, #tpu.memory_space<vmem>>, vector<16x32xf32>
      tpu.vector_store %arg11[%c0_116, %c96_117], %154 {strides = array<i32>} : memref<16x128xf32, #tpu.memory_space<vmem>>, vector<16x32xf32>,
      %c0_118 = arith.constant 0 : index
      %c3_119 = arith.constant 3 : index
      %156 = vector.load %arg9[%c0_118, %c3_119] : memref<16x4xf32, #tpu.memory_space<vmem>>, vector<16x1xf32>
      tpu.vector_store %arg9[%c0_118, %c3_119], %138 {strides = array<i32>} : memref<16x4xf32, #tpu.memory_space<vmem>>, vector<16x1xf32>,
    } else {
    }
    %c0_i32_2 = arith.constant 0 : i32
    %10 = arith.cmpi eq, %arg2, %c0_i32_2 : i32
    %11 = arith.extui %10 : i1 to i32
    %c0_i32_3 = arith.constant 0 : i32
    %12 = arith.cmpi ne, %11, %c0_i32_3 : i32
    scf.if %12 {
      %c0 = arith.constant 0 : index
      %c0_4 = arith.constant 0 : index
      %13 = vector.load %arg10[%c0, %c0_4] : memref<16x4xf32, #tpu.memory_space<vmem>>, vector<16x1xf32>
      %14 = tpu.reciprocal %13 {approx = true} : vector<16x1xf32> -> vector<16x1xf32>
      %c0_5 = arith.constant 0 : index
      %c0_6 = arith.constant 0 : index
      %15 = vector.load %arg11[%c0_5, %c0_6] : memref<16x128xf32, #tpu.memory_space<vmem>>, vector<16x32xf32>
      %16 = vector.broadcast %14 : vector<16x1xf32> to vector<16x32xf32>
      %17 = arith.mulf %15, %16 : vector<16x32xf32>
      %c0_7 = arith.constant 0 : index
      %c1 = arith.constant 1 : index
      %18 = vector.load %arg10[%c0_7, %c1] : memref<16x4xf32, #tpu.memory_space<vmem>>, vector<16x1xf32>
      %19 = tpu.reciprocal %18 {approx = true} : vector<16x1xf32> -> vector<16x1xf32>
      %c0_8 = arith.constant 0 : index
      %c32 = arith.constant 32 : index
      %20 = vector.load %arg11[%c0_8, %c32] : memref<16x128xf32, #tpu.memory_space<vmem>>, vector<16x32xf32>
      %21 = vector.broadcast %19 : vector<16x1xf32> to vector<16x32xf32>
      %22 = arith.mulf %20, %21 : vector<16x32xf32>
      %c0_9 = arith.constant 0 : index
      %c2 = arith.constant 2 : index
      %23 = vector.load %arg10[%c0_9, %c2] : memref<16x4xf32, #tpu.memory_space<vmem>>, vector<16x1xf32>
      %24 = tpu.reciprocal %23 {approx = true} : vector<16x1xf32> -> vector<16x1xf32>
      %c0_10 = arith.constant 0 : index
      %c64 = arith.constant 64 : index
      %25 = vector.load %arg11[%c0_10, %c64] : memref<16x128xf32, #tpu.memory_space<vmem>>, vector<16x32xf32>
      %26 = vector.broadcast %24 : vector<16x1xf32> to vector<16x32xf32>
      %27 = arith.mulf %25, %26 : vector<16x32xf32>
      %c0_11 = arith.constant 0 : index
      %c3 = arith.constant 3 : index
      %28 = vector.load %arg10[%c0_11, %c3] : memref<16x4xf32, #tpu.memory_space<vmem>>, vector<16x1xf32>
      %29 = tpu.reciprocal %28 {approx = true} : vector<16x1xf32> -> vector<16x1xf32>
      %c0_12 = arith.constant 0 : index
      %c96 = arith.constant 96 : index
      %30 = vector.load %arg11[%c0_12, %c96] : memref<16x128xf32, #tpu.memory_space<vmem>>, vector<16x32xf32>
      %31 = vector.broadcast %29 : vector<16x1xf32> to vector<16x32xf32>
      %32 = arith.mulf %30, %31 : vector<16x32xf32>
      %33 = tpu.concatenate %17, %22, %27, %32 in 1 : vector<16x32xf32>, vector<16x32xf32>, vector<16x32xf32>, vector<16x32xf32> -> vector<16x128xf32>
      %c0_13 = arith.constant 0 : index
      %c0_14 = arith.constant 0 : index
      %c0_15 = arith.constant 0 : index
      %c0_16 = arith.constant 0 : index
      %34 = vector.load %arg8[%c0_13, %c0_14, %c0_15, %c0_16] : memref<1x1x16x128xf32, #tpu.memory_space<vmem>>, vector<1x1x16x128xf32>
      %35 = vector.shape_cast %34 : vector<1x1x16x128xf32> to vector<16x128xf32>
      %36 = vector.shape_cast %33 : vector<16x128xf32> to vector<1x1x16x128xf32>
      tpu.vector_store %arg8[%c0_13, %c0_14, %c0_15, %c0_16], %36 {strides = array<i32>} : memref<1x1x16x128xf32, #tpu.memory_space<vmem>>, vector<1x1x16x128xf32>,
    } else {
    }
    return
  }
  func.func @transform_0(%arg0: i32, %arg1: i32, %arg2: i32, %arg3: memref<2xi32, #tpu.memory_space<smem>>) -> (i32, i32, i32, i32) {
    %c0_i32 = arith.constant 0 : i32
    %c0_i32_0 = arith.constant 0 : i32
    %c0_i32_1 = arith.constant 0 : i32
    return %arg0, %arg1, %c0_i32, %c0_i32_0 : i32, i32, i32, i32
  }
  func.func @transform_1(%arg0: i32, %arg1: i32, %arg2: i32, %arg3: memref<2xi32, #tpu.memory_space<smem>>) -> (i32, i32, i32) {
    %c1_i32 = arith.constant 1 : i32
    %0 = arith.muli %arg0, %c1_i32 : i32
    %1 = arith.addi %0, %arg1 : i32
    %2 = arith.index_cast %1 : i32 to index
    %3 = memref.load %arg3[%2] : memref<2xi32, #tpu.memory_space<smem>>
    %4 = arith.minsi %arg2, %3 : i32
    %c0_i32 = arith.constant 0 : i32
    return %arg0, %4, %arg1 : i32, i32, i32
  }
  func.func @transform_2(%arg0: i32, %arg1: i32, %arg2: i32, %arg3: memref<2xi32, #tpu.memory_space<smem>>) -> (i32, i32, i32) {
    %c1_i32 = arith.constant 1 : i32
    %0 = arith.muli %arg0, %c1_i32 : i32
    %1 = arith.addi %0, %arg1 : i32
    %2 = arith.index_cast %1 : i32 to index
    %3 = memref.load %arg3[%2] : memref<2xi32, #tpu.memory_space<smem>>
    %4 = arith.minsi %arg2, %3 : i32
    %c0_i32 = arith.constant 0 : i32
    return %arg0, %4, %arg1 : i32, i32, i32
  }
  func.func @transform_3(%arg0: i32, %arg1: i32, %arg2: i32, %arg3: memref<2xi32, #tpu.memory_space<smem>>) -> (i32, i32, i32, i32) {
    %c0_i32 = arith.constant 0 : i32
    %c0_i32_0 = arith.constant 0 : i32
    %c0_i32_1 = arith.constant 0 : i32
    return %arg0, %arg1, %c0_i32, %c0_i32_0 : i32, i32, i32, i32
  }
  func.func @transform_4(%arg0: i32, %arg1: i32, %arg2: i32, %arg3: memref<2xi32, #tpu.memory_space<smem>>) -> (i32, i32, i32, i32) {
    %c0_i32 = arith.constant 0 : i32
    %c0_i32_0 = arith.constant 0 : i32
    %c0_i32_1 = arith.constant 0 : i32
    return %arg0, %arg1, %c0_i32, %c0_i32_0 : i32, i32, i32, i32
  }
}

</mosaic_0001>

<llo_original>
// kernel: tpu_custom_call.1
$region0: #{tpu_custom_call.1}
  #allocation0 [shape = 'u32[]', space=smem, size = 0x4, offset = 0x4, fixed_abs, tag = 'smem constant byte address 0x4 - core index']
  #allocation1 [shape = 'u32[144,128]{1,0:T(1,128)}', space=vmem, size = 0x12000, scoped, tag = 'internal scratch']
  #allocation2 [shape = 'f32[16,4]{1,0:T(8,128)}', space=vmem, size = 0x2000, scoped, tag = 'scratch operand']
  #allocation3 [shape = 'f32[16,4]{1,0:T(8,128)}', space=vmem, size = 0x2000, scoped, tag = 'scratch operand']
  #allocation4 [shape = 'f32[16,128]{1,0:T(8,128)}', space=vmem, size = 0x2000, scoped, tag = 'scratch operand']
  #allocation5 [shape = 's32[1]{0}', space=sflag, size = 0x4, scoped, tag = 'scoped memory for tpu_custom_call.1']
  #allocation6 [shape = 'u8[512]{0}', space=smem, size = 0x200, scoped, tag = 'prefetched SMEM operand 0']
  %s0 = inlined_call_operand.vmem [shape: s32[2], index: 0, kind: input, shape index: {}]
  %s1 = inlined_call_operand.vmem [shape: f32[2,1,16,128], index: 1, kind: input, shape index: {}]
  %s2 = inlined_call_operand.hbm [shape: f32[2,16,128], index: 2, kind: input, shape index: {}]
  %s3 = inlined_call_operand.hbm [shape: f32[2,16,128], index: 3, kind: input, shape index: {}]
  %s4 = inlined_call_operand.vmem [shape: s32[2,1,16,4], index: 4, kind: input, shape index: {}]
  %s5 = inlined_call_operand.hbm [shape: f32[2,1,16,128], index: 5, kind: output, shape index: {}]
  %s6 = sld [smem:[#allocation0]]
  $region69: #{tpu_custom_call.1} parent=0
    _
  %s8 = ssub.s32 1, %s6
  %s9 = scalar_select 0, %s8, %s6
  %s10 = sshll.u32 %s0, 4
  %s11 = int_to_ptr.vmem [resolvable:$true] %s10
  %13 = dma.vmem_to_smem %s11, 16, [#allocation6], [#allocation5]
  %14 = dma.done [#allocation5], 16
  %15 = sfence
  $region1: #{tpu_custom_call.1} parent=0
    #allocation7 [shape = 'u8[16384]{0}', space=vmem, size = 0x4000, scoped, tag = 'input window, operand 2']
    #allocation8 [shape = 's32[2]{0}', space=sflag, size = 0x8, scoped, tag = 'scoped memory for tpu_custom_call.1']
    #allocation9 [shape = 's32[2]{0}', space=sflag, size = 0x8, scoped, tag = 'scoped memory for tpu_custom_call.1']
    #allocation10 [shape = 'u8[16384]{0}', space=vmem, size = 0x4000, scoped, tag = 'input window, operand 3']
    #allocation11 [shape = 's32[2]{0}', space=sflag, size = 0x8, scoped, tag = 'scoped memory for tpu_custom_call.1']
    #allocation12 [shape = 'u8[16384]{0}', space=vmem, size = 0x4000, scoped, tag = 'output window, operand 0']
    %16 = vsyncpa [#allocation8], 0
    %s17 = scalar_lea.sflag [#allocation8], 1
    %18 = vsyncpa %s17, 0
    %19 = vsyncpa [#allocation11], 0
    %s20 = scalar_lea.sflag [#allocation11], 1
    %21 = vsyncpa %s20, 0
    %22 = vsyncpa [#allocation9], 0
    %s23 = scalar_lea.sflag [#allocation9], 1
    %24 = vsyncpa %s23, 0
    loop: start=0, step=1, limit=4
    $region2: #{tpu_custom_call.1} parent=1 // loop_pre_header
      _
    $region3: #{tpu_custom_call.1} parent=1 // loop_header
      %s26 = sphi 0, %s30
      %p27 = scmp.ge.s32.totalorder %s26, 4
      %s33 = sphi 0, %s52
      %s34 = sphi 0, %s48
      %s35 = sphi 0, %s44
      %s36 = sphi 0, %s33
      %s37 = sphi 0, %s34
      %s38 = sphi 0, %s35
      %s39 = sphi 0, %s36
      %s40 = sphi 0, %s37
      %s41 = sphi 0, %s38
      %s57 = sphi 0, %s59
      %s60 = sphi 0, %s57
      %s61 = sphi 0, %s60
      %s77 = sphi 0, %s61
      %s95 = sphi 0, %s97
      %s98 = sphi 0, %s95
      %s99 = sphi 0, %s98
      %s115 = sphi 0, %s99
      %s133 = sphi 0, %s135
      %s136 = sphi 0, %s133
      %s137 = sphi 0, %s136
      %s153 = sphi 0, %s137
      %s161 = sphi 0, %s163
      %s164 = sphi 0, %s161
      %s165 = sphi 0, %s164
      %s181 = sphi 0, %s165
      %s189 = sphi 0, %s191
      %s192 = sphi 0, %s189
      %s193 = sphi 0, %s192
      %s209 = sphi 0, %s193
    $region4: #{tpu_custom_call.1} parent=1 // loop_header_branch
      %29 = sbr.rel (%p27) target = $region8
    $region5: #{tpu_custom_call.1} parent=1 // loop_body
      %s31 = ssub.s32 %s26, 1
      %s32 = ssub.s32 %s26, 2
      %s42 = sadd.s32 1, %s35
      %p43 = scmp.ge.s32.totalorder %s42, 1
      %s44 = scalar_select %p43, 0, %s42
      %s45 = sadd.s32 1, %s34
      %s46 = scalar_select %p43, %s45, %s34
      %p47 = scmp.ge.s32.totalorder %s46, 1
      %s48 = scalar_select %p47, 0, %s46
      %s49 = sadd.s32 1, %s33
      %s50 = scalar_select %p47, %s49, %s33
      %p51 = scmp.ge.s32.totalorder %s50, 2
      %s52 = scalar_select %p51, 0, %s50
      %s53 = ssub.s32 %s33, %s52
      %s54 = ssub.s32 %s34, %s48
      %s55 = sor.u32 %s53, %s54
      %p56 = scmp.eq.s32.totalorder %s55, 0
      %s58 = sadd.s32 %s57, 1
      %s59 = scalar_select %p56, %s57, %s58
      %p62 = pneg %p56
      %p63 = scmp.eq.s32.totalorder %s26, 1
      %p64 = por %p62, %p63
      %p65 = scmp.ne.s32.totalorder %s57, %s60
      %p66 = scmp.eq.s32.totalorder %s26, 0
      %p67 = por %p65, %p66
      %p68 = scmp.ne.s32.totalorder %s57, %s60
      %p69 = scmp.eq.s32.totalorder %s31, 1
      %p70 = por %p68, %p69
      %p71 = scmp.ne.s32.totalorder %s60, %s61
      %p72 = scmp.eq.s32.totalorder %s31, 0
      %p73 = por %p71, %p72
      %p74 = scmp.ne.s32.totalorder %s60, %s61
      %p75 = scmp.eq.s32.totalorder %s32, 1
      %p76 = por %p74, %p75
      %p78 = scmp.ne.s32.totalorder %s61, %s77
      %p79 = scmp.eq.s32.totalorder %s32, 0
      %p80 = por %p78, %p79
      %s81 = sadd.s32 %s33, %s34
      %s82 = sld [smem:[#allocation6 + %s81]]
      %p83 = scmp.lt.s32.totalorder %s35, %s82
      %s84 = scalar_select %p83, %s35, %s82
      %s85 = sadd.s32 %s52, %s48
      %s86 = sld [smem:[#allocation6 + %s85]]
      %p87 = scmp.lt.s32.totalorder %s44, %s86
      %s88 = scalar_select %p87, %s44, %s86
      %s89 = ssub.s32 %s33, %s52
      %s90 = ssub.s32 %s84, %s88
      %s91 = sor.u32 %s89, %s90
      %s92 = ssub.s32 %s34, %s48
      %s93 = sor.u32 %s91, %s92
      %p94 = scmp.eq.s32.totalorder %s93, 0
      %s96 = sadd.s32 %s95, 1
      %s97 = scalar_select %p94, %s95, %s96
      %p100 = pneg %p94
      %p101 = scmp.eq.s32.totalorder %s26, 1
      %p102 = por %p100, %p101
      %p103 = scmp.ne.s32.totalorder %s95, %s98
      %p104 = scmp.eq.s32.totalorder %s26, 0
      %p105 = por %p103, %p104
      %p106 = scmp.ne.s32.totalorder %s95, %s98
      %p107 = scmp.eq.s32.totalorder %s31, 1
      %p108 = por %p106, %p107
      %p109 = scmp.ne.s32.totalorder %s98, %s99
      %p110 = scmp.eq.s32.totalorder %s31, 0
      %p111 = por %p109, %p110
      %p112 = scmp.ne.s32.totalorder %s98, %s99
      %p113 = scmp.eq.s32.totalorder %s32, 1
      %p114 = por %p112, %p113
      %p116 = scmp.ne.s32.totalorder %s99, %s115
      %p117 = scmp.eq.s32.totalorder %s32, 0
      %p118 = por %p116, %p117
      %s119 = sadd.s32 %s33, %s34
      %s120 = sld [smem:[#allocation6 + %s119]]
      %p121 = scmp.lt.s32.totalorder %s35, %s120
      %s122 = scalar_select %p121, %s35, %s120
      %s123 = sadd.s32 %s52, %s48
      %s124 = sld [smem:[#allocation6 + %s123]]
      %p125 = scmp.lt.s32.totalorder %s44, %s124
      %s126 = scalar_select %p125, %s44, %s124
      %s127 = ssub.s32 %s33, %s52
      %s128 = ssub.s32 %s122, %s126
      %s129 = sor.u32 %s127, %s128
      %s130 = ssub.s32 %s34, %s48
      %s131 = sor.u32 %s129, %s130
      %p132 = scmp.eq.s32.totalorder %s131, 0
      %s134 = sadd.s32 %s133, 1
      %s135 = scalar_select %p132, %s133, %s134
      %p138 = pneg %p132
      %p139 = scmp.eq.s32.totalorder %s26, 1
      %p140 = por %p138, %p139
      %p141 = scmp.ne.s32.totalorder %s133, %s136
      %p142 = scmp.eq.s32.totalorder %s26, 0
      %p143 = por %p141, %p142
      %p144 = scmp.ne.s32.totalorder %s133, %s136
      %p145 = scmp.eq.s32.totalorder %s31, 1
      %p146 = por %p144, %p145
      %p147 = scmp.ne.s32.totalorder %s136, %s137
      %p148 = scmp.eq.s32.totalorder %s31, 0
      %p149 = por %p147, %p148
      %p150 = scmp.ne.s32.totalorder %s136, %s137
      %p151 = scmp.eq.s32.totalorder %s32, 1
      %p152 = por %p150, %p151
      %p154 = scmp.ne.s32.totalorder %s137, %s153
      %p155 = scmp.eq.s32.totalorder %s32, 0
      %p156 = por %p154, %p155
      %s157 = ssub.s32 %s33, %s52
      %s158 = ssub.s32 %s34, %s48
      %s159 = sor.u32 %s157, %s158
      %p160 = scmp.eq.s32.totalorder %s159, 0
      %s162 = sadd.s32 %s161, 1
      %s163 = scalar_select %p160, %s161, %s162
      %p166 = pneg %p160
      %p167 = scmp.eq.s32.totalorder %s26, 1
      %p168 = por %p166, %p167
      %p169 = scmp.ne.s32.totalorder %s161, %s164
      %p170 = scmp.eq.s32.totalorder %s26, 0
      %p171 = por %p169, %p170
      %p172 = scmp.ne.s32.totalorder %s161, %s164
      %p173 = scmp.eq.s32.totalorder %s31, 1
      %p174 = por %p172, %p173
      %p175 = scmp.ne.s32.totalorder %s164, %s165
      %p176 = scmp.eq.s32.totalorder %s31, 0
      %p177 = por %p175, %p176
      %p178 = scmp.ne.s32.totalorder %s164, %s165
      %p179 = scmp.eq.s32.totalorder %s32, 1
      %p180 = por %p178, %p179
      %p182 = scmp.ne.s32.totalorder %s165, %s181
      %p183 = scmp.eq.s32.totalorder %s32, 0
      %p184 = por %p182, %p183
      %s185 = ssub.s32 %s33, %s52
      %s186 = ssub.s32 %s34, %s48
      %s187 = sor.u32 %s185, %s186
      %p188 = scmp.eq.s32.totalorder %s187, 0
      %s190 = sadd.s32 %s189, 1
      %s191 = scalar_select %p188, %s189, %s190
      %p194 = pneg %p188
      %p195 = scmp.eq.s32.totalorder %s26, 1
      %p196 = por %p194, %p195
      %p197 = scmp.ne.s32.totalorder %s189, %s192
      %p198 = scmp.eq.s32.totalorder %s26, 0
      %p199 = por %p197, %p198
      %p200 = scmp.ne.s32.totalorder %s189, %s192
      %p201 = scmp.eq.s32.totalorder %s31, 1
      %p202 = por %p200, %p201
      %p203 = scmp.ne.s32.totalorder %s192, %s193
      %p204 = scmp.eq.s32.totalorder %s31, 0
      %p205 = por %p203, %p204
      %p206 = scmp.ne.s32.totalorder %s192, %s193
      %p207 = scmp.eq.s32.totalorder %s32, 1
      %p208 = por %p206, %p207
      %p210 = scmp.ne.s32.totalorder %s193, %s209
      %p211 = scmp.eq.s32.totalorder %s32, 0
      %p212 = por %p210, %p211
      %p213 = scmp.le.s32.totalorder 1, %s26
      %p214 = scmp.lt.s32.totalorder %s26, 3
      %p215 = pnand %p213, %p214
      %p216 = pneg %p215
      // Predicated region
      $region9: #{tpu_custom_call.1} parent=5 // pred_check
        _
      $region10: #{tpu_custom_call.1} parent=5 // pred_check_branch
        %218 = sbr.rel (%p215) target = $region12
      $region11: #{tpu_custom_call.1} parent=5 // pred_region
        %s219 = ssub.s32 %s26, 1
      $region12: #{tpu_custom_call.1} parent=5 // pred_fallthru
        _
      %p220 = scmp.lt.s32.totalorder %s26, 2
      // Predicated region
      $region13: #{tpu_custom_call.1} parent=5 // pred_check
        %p221 = pneg %p220
      $region14: #{tpu_custom_call.1} parent=5 // pred_check_branch
        %223 = sbr.rel (%p221) target = $region16
      $region15: #{tpu_custom_call.1} parent=5 // pred_region
        // Predicated region
        $region17: #{tpu_custom_call.1} parent=15 // pred_check
          %p224 = pneg %p67
        $region18: #{tpu_custom_call.1} parent=15 // pred_check_branch
          %226 = sbr.rel (%p224) target = $region20
        $region19: #{tpu_custom_call.1} parent=15 // pred_region
          %p227 = scmp.lt.s32.totalorder %s33, 1
          %s228 = scalar_select %p227, %s33, 1
          %p229 = scmp.lt.s32.totalorder %s34, 0
          %s230 = scalar_select %p229, %s34, 0
          %s231 = smul.addr %s230, 2
          %s232 = smul.addr %s228, 2
          %s233 = sadd.s32 %s231, %s232
          %s234 = smul.addr %s233, 8
          %s235 = scalar_lea.vmem %s1, %s234
        $region20: #{tpu_custom_call.1} parent=15 // pred_fallthru
          _
        // Predicated region
        $region21: #{tpu_custom_call.1} parent=15 // pred_check
          %p236 = pneg %p105
        $region22: #{tpu_custom_call.1} parent=15 // pred_check_branch
          %238 = sbr.rel (%p236) target = $region24
        $region23: #{tpu_custom_call.1} parent=15 // pred_region
          %s239 = sand.u32 %s95, 1
          %s240 = scalar_lea.sflag [#allocation8], %s239
          %s241 = sand.u32 %s95, 1
          %s242 = smul.addr %s241, 16
          %s243 = scalar_lea.vmem [#allocation7], %s242
          %s244 = sadd.s32 %s33, %s34
          %s245 = sld [smem:[#allocation6 + %s244]]
          %p246 = scmp.lt.s32.totalorder %s35, %s245
          %s247 = scalar_select %p246, %s35, %s245
          %s248 = smul.u32 2, %s247
          %s250 = ssub.s32 256, 256
          %251 = vsyncadd %s240, %s250
          %s252 = sadd.s32 %s34, %s248
          %s253 = smul.addr %s33, 2
          %s254 = sadd.s32 %s252, %s253
          %s255 = smul.addr %s254, 128
          %s256 = scalar_lea.hbm %s2, %s255
          %s257 = sshll.u32 %s243, 4
          %s258 = int_to_ptr.vmem [resolvable:$true] %s257
          %263 = dma.hbm_to_vmem [thread:$0]  %s256, 256, %s258, %s240, 128, 128, 8
        $region24: #{tpu_custom_call.1} parent=15 // pred_fallthru
          _
        // Predicated region
        $region25: #{tpu_custom_call.1} parent=15 // pred_check
          %p264 = pneg %p143
        $region26: #{tpu_custom_call.1} parent=15 // pred_check_branch
          %266 = sbr.rel (%p264) target = $region28
        $region27: #{tpu_custom_call.1} parent=15 // pred_region
          %s267 = sand.u32 %s133, 1
          %s268 = scalar_lea.sflag [#allocation11], %s267
          %s269 = sand.u32 %s133, 1
          %s270 = smul.addr %s269, 16
          %s271 = scalar_lea.vmem [#allocation10], %s270
          %s272 = sadd.s32 %s33, %s34
          %s273 = sld [smem:[#allocation6 + %s272]]
          %p274 = scmp.lt.s32.totalorder %s35, %s273
          %s275 = scalar_select %p274, %s35, %s273
          %s276 = smul.u32 2, %s275
          %s278 = ssub.s32 256, 256
          %279 = vsyncadd %s268, %s278
          %s280 = sadd.s32 %s34, %s276
          %s281 = smul.addr %s33, 2
          %s282 = sadd.s32 %s280, %s281
          %s283 = smul.addr %s282, 128
          %s284 = scalar_lea.hbm %s3, %s283
          %s285 = sshll.u32 %s271, 4
          %s286 = int_to_ptr.vmem [resolvable:$true] %s285
          %291 = dma.hbm_to_vmem [thread:$0]  %s284, 256, %s286, %s268, 128, 128, 8
        $region28: #{tpu_custom_call.1} parent=15 // pred_fallthru
          _
        // Predicated region
        $region29: #{tpu_custom_call.1} parent=15 // pred_check
          %p292 = pneg %p171
        $region30: #{tpu_custom_call.1} parent=15 // pred_check_branch
          %294 = sbr.rel (%p292) target = $region32
        $region31: #{tpu_custom_call.1} parent=15 // pred_region
          %p295 = scmp.lt.s32.totalorder %s33, 1
          %s296 = scalar_select %p295, %s33, 1
          %p297 = scmp.lt.s32.totalorder %s34, 0
          %s298 = scalar_select %p297, %s34, 0
          %s299 = smul.addr %s298, 2
          %s300 = smul.addr %s296, 2
          %s301 = sadd.s32 %s299, %s300
          %s302 = smul.addr %s301, 8
          %s303 = scalar_lea.vmem %s4, %s302
        $region32: #{tpu_custom_call.1} parent=15 // pred_fallthru
          _
      $region16: #{tpu_custom_call.1} parent=5 // pred_fallthru
        _
      %p304 = scmp.le.s32.totalorder 1, %s26
      %p305 = scmp.lt.s32.totalorder %s26, 3
      %p306 = pnand %p304, %p305
      %p307 = pneg %p306
      // Predicated region
      $region33: #{tpu_custom_call.1} parent=5 // pred_check
        _
      $region34: #{tpu_custom_call.1} parent=5 // pred_check_branch
        %309 = sbr.rel (%p306) target = $region36
      $region35: #{tpu_custom_call.1} parent=5 // pred_region
        %s310 = ssub.s32 %s26, 1
        %s311 = sand.u32 %s98, 1
        %s312 = scalar_lea.sflag [#allocation8], %s311
        %s313 = sand.u32 %s98, 1
        %s314 = smul.addr %s313, 16
        %s315 = scalar_lea.vmem [#allocation7], %s314
        // Predicated region
        $region37: #{tpu_custom_call.1} parent=35 // pred_check
          %p316 = pneg %p111
        $region38: #{tpu_custom_call.1} parent=35 // pred_check_branch
          %318 = sbr.rel (%p316) target = $region40
        $region39: #{tpu_custom_call.1} parent=35 // pred_region
          %319 = dma.done %s312, 256
        $region40: #{tpu_custom_call.1} parent=35 // pred_fallthru
          _
        %s320 = sand.u32 %s136, 1
        %s321 = scalar_lea.sflag [#allocation11], %s320
        %s322 = sand.u32 %s136, 1
        %s323 = smul.addr %s322, 16
        %s324 = scalar_lea.vmem [#allocation10], %s323
        // Predicated region
        $region41: #{tpu_custom_call.1} parent=35 // pred_check
          %p325 = pneg %p149
        $region42: #{tpu_custom_call.1} parent=35 // pred_check_branch
          %327 = sbr.rel (%p325) target = $region44
        $region43: #{tpu_custom_call.1} parent=35 // pred_region
          %328 = dma.done %s321, 256
        $region44: #{tpu_custom_call.1} parent=35 // pred_fallthru
          _
        %p329 = scmp.lt.s32.totalorder %s36, 1
        %s330 = scalar_select %p329, %s36, 1
        %p331 = scmp.lt.s32.totalorder %s37, 0
        %s332 = scalar_select %p331, %s37, 0
        %s333 = smul.addr %s332, 2
        %s334 = smul.addr %s330, 2
        %s335 = sadd.s32 %s333, %s334
        %s336 = smul.addr %s335, 8
        %s337 = scalar_lea.vmem %s1, %s336
        %p338 = pneg %p73
        %p339 = pneg %p70
        %s340 = sand.u32 %s98, 1
        %s341 = scalar_lea.sflag [#allocation8], %s340
        %s342 = sand.u32 %s98, 1
        %s343 = smul.addr %s342, 16
        %s344 = scalar_lea.vmem [#allocation7], %s343
        %p345 = pneg %p111
        %p346 = pneg %p108
        %s347 = sand.u32 %s136, 1
        %s348 = scalar_lea.sflag [#allocation11], %s347
        %s349 = sand.u32 %s136, 1
        %s350 = smul.addr %s349, 16
        %s351 = scalar_lea.vmem [#allocation10], %s350
        %p352 = pneg %p149
        %p353 = pneg %p146
        %p354 = scmp.lt.s32.totalorder %s36, 1
        %s355 = scalar_select %p354, %s36, 1
        %p356 = scmp.lt.s32.totalorder %s37, 0
        %s357 = scalar_select %p356, %s37, 0
        %s358 = smul.addr %s357, 2
        %s359 = smul.addr %s355, 2
        %s360 = sadd.s32 %s358, %s359
        %s361 = smul.addr %s360, 8
        %s362 = scalar_lea.vmem %s4, %s361
        %p363 = pneg %p177
        %p364 = pneg %p174
        %p365 = pneg %p205
        %p366 = pneg %p202
        %s367 = sand.u32 %s192, 1
        %s368 = scalar_lea.sflag [#allocation9], %s367
        %s369 = sand.u32 %s192, 1
        %s370 = smul.addr %s369, 16
        %s371 = scalar_lea.vmem [#allocation12], %s370
        %p372 = scmp.lt.s32.totalorder %s36, 1
        %s373 = scalar_select %p372, %s36, 1
        %p374 = scmp.lt.s32.totalorder %s37, 0
        %s375 = scalar_select %p374, %s37, 0
        %s376 = smul.addr %s375, 2
        %s377 = smul.addr %s373, 2
        %s378 = sadd.s32 %s376, %s377
        %s379 = smul.addr %s378, 8
        %s380 = scalar_lea.vmem %s1, %s379
        %s381 = sadd.s32 %s36, %s37
        %s382 = sld [smem:[#allocation6 + %s381]]
        %p383 = scmp.lt.s32.totalorder %s38, %s382
        %s384 = scalar_select %p383, %s38, %s382
        %s385 = smul.u32 2, %s384
        %s386 = sadd.s32 %s36, %s37
        %s387 = sld [smem:[#allocation6 + %s386]]
        %p388 = scmp.lt.s32.totalorder %s38, %s387
        %s389 = scalar_select %p388, %s38, %s387
        %s390 = smul.u32 2, %s389
        %p391 = scmp.lt.s32.totalorder %s36, 1
        %s392 = scalar_select %p391, %s36, 1
        %p393 = scmp.lt.s32.totalorder %s37, 0
        %s394 = scalar_select %p393, %s37, 0
        %s395 = smul.addr %s394, 2
        %s396 = smul.addr %s392, 2
        %s397 = sadd.s32 %s395, %s396
        %s398 = smul.addr %s397, 8
        %s399 = scalar_lea.vmem %s4, %s398
        %p400 = scmp.eq.s32.totalorder %s38, 0
        // Predicated region
        $region45: #{tpu_custom_call.1} parent=35 // pred_check
          %p401 = pneg %p400
        $region46: #{tpu_custom_call.1} parent=35 // pred_check_branch
          %403 = sbr.rel (%p401) target = $region48
        $region47: #{tpu_custom_call.1} parent=35 // pred_region
          %vm404 = vcmask 31744
          %405 = vst.msk [vmem:[#allocation2] sm:$0xff] %vm404, -inf
          %406 = vst.msk [vmem:[#allocation2 + $0x8] sm:$0xff] %vm404, -inf
          %407 = vst.msk [vmem:[#allocation3] sm:$0xff] %vm404, 0.0
          %408 = vst.msk [vmem:[#allocation3 + $0x8] sm:$0xff] %vm404, 0.0
          %409 = vst [vmem:[#allocation4] sm:$0xff] 0.0
          %410 = vst [vmem:[#allocation4 + $0x8] sm:$0xff] 0.0
        $region48: #{tpu_custom_call.1} parent=35 // pred_fallthru
          _
        %s411 = sadd.s32 %s36, %s37
        %s412 = sld [smem:[#allocation6 + %s411]]
        %p413 = scmp.le.s32.totalorder %s38, %s412
        // Predicated region
        $region49: #{tpu_custom_call.1} parent=35 // pred_check
          %p414 = pneg %p413
        $region50: #{tpu_custom_call.1} parent=35 // pred_check_branch
          %416 = sbr.rel (%p414) target = $region52
        $region51: #{tpu_custom_call.1} parent=35 // pred_region
          %s417 = smul.u32 %s38, 16
          %v418 = vlaneseq
          %v419 = vand.u32 %v418, 127
          %v420 = vstv %s417
          %v421 = vadd.s32 %v420, %v419
          %v422 = vld [vmem:[%s380] sm:$0xff]
          %v423 = vld [vmem:[%s380 + $0x8] sm:$0xff]
          %v424 = vld [vmem:[%s315] sm:$0xff]
          %v425 = vld [vmem:[%s315 + $0x8] sm:$0xff]
          %v426 = vld [vmem:[%s324] sm:$0xff]
          %v427 = vld [vmem:[%s324 + $0x8] sm:$0xff]
          %vm428 = vcmask 261120
          %v430 = vsel %vm428, %v422, 0
          %v433 = vsel %vm428, %v423, 0
          %v436 = vsel %vm428, %v424, 0
          %v439 = vsel %vm428, %v425, 0
          %441 = vmatprep.subr.mxu0 0.0
          %442 = vmatpush1.xpose.msra.mxu0 0.0
          %443 = vmatprep.subr.mxu0 0.0
          %444 = vmatpush1.xpose.msra.mxu0 0.0
          %445 = vmatprep.subr.mxu0 0.0
          %446 = vmatpush1.xpose.msra.mxu0 0.0
          %447 = vmatprep.subr.mxu0 0.0
          %448 = vmatpush1.xpose.msra.mxu0 0.0
          %449 = vmatprep.subr.mxu0 0.0
          %450 = vmatpush1.xpose.msra.mxu0 0.0
          %451 = vmatprep.subr.mxu0 0.0
          %452 = vmatpush1.xpose.msra.mxu0 0.0
          %453 = vmatprep.subr.mxu0 0.0
          %454 = vmatpush1.xpose.msra.mxu0 0.0
          %455 = vmatprep.subr.mxu0 0.0
          %456 = vmatpush1.xpose.msra.mxu0 0.0
          %457 = vmatprep.subr.mxu0 0.0
          %458 = vmatpush1.xpose.msra.mxu0 0.0
          %459 = vmatprep.subr.mxu0 0.0
          %460 = vmatpush1.xpose.msra.mxu0 0.0
          %461 = vmatprep.subr.mxu0 0.0
          %462 = vmatpush1.xpose.msra.mxu0 0.0
          %463 = vmatprep.subr.mxu0 0.0
          %464 = vmatpush1.xpose.msra.mxu0 0.0
          %465 = vmatprep.subr.mxu0 0.0
          %466 = vmatpush1.xpose.msra.mxu0 0.0
          %467 = vmatprep.subr.mxu0 0.0
          %468 = vmatpush1.xpose.msra.mxu0 0.0
          %469 = vmatprep.subr.mxu0 0.0
          %470 = vmatpush1.xpose.msra.mxu0 %v439
          %471 = vmatprep.subr.mxu0 0.0
          %472 = vmatpush1.xpose.msra.mxu0 %v436
          %473 = vmatprep.subr.mxu0 0.0
          %474 = vmatpush2.xpose.msra.mxu0 0.0
          %475 = vmatprep.subr.mxu0 0.0
          %476 = vmatpush2.xpose.msra.mxu0 0.0
          %477 = vmatprep.subr.mxu0 0.0
          %478 = vmatpush2.xpose.msra.mxu0 0.0
          %479 = vmatprep.subr.mxu0 0.0
          %480 = vmatpush2.xpose.msra.mxu0 0.0
          %481 = vmatprep.subr.mxu0 0.0
          %482 = vmatpush2.xpose.msra.mxu0 0.0
          %483 = vmatprep.subr.mxu0 0.0
          %484 = vmatpush2.xpose.msra.mxu0 0.0
          %485 = vmatprep.subr.mxu0 0.0
          %486 = vmatpush2.xpose.msra.mxu0 0.0
          %487 = vmatprep.subr.mxu0 0.0
          %488 = vmatpush2.xpose.msra.mxu0 0.0
          %489 = vmatprep.subr.mxu0 0.0
          %490 = vmatpush2.xpose.msra.mxu0 0.0
          %491 = vmatprep.subr.mxu0 0.0
          %492 = vmatpush2.xpose.msra.mxu0 0.0
          %493 = vmatprep.subr.mxu0 0.0
          %494 = vmatpush2.xpose.msra.mxu0 0.0
          %495 = vmatprep.subr.mxu0 0.0
          %496 = vmatpush2.xpose.msra.mxu0 0.0
          %497 = vmatprep.subr.mxu0 0.0
          %498 = vmatpush2.xpose.msra.mxu0 0.0
          %499 = vmatprep.subr.mxu0 0.0
          %500 = vmatpush2.xpose.msra.mxu0 0.0
          %501 = vmatprep.subr.mxu0 0.0
          %502 = vmatpush2.xpose.msra.mxu0 0.0
          %503 = vmatprep.subr.mxu0 0.0
          %504 = vmatpush2.xpose.msra.mxu0 0.0
          %505 = vmatprep.mubr.f32.mxu0 0.0
          %506 = vmatmul.mubr.f32.gmra.mxu0 %v430
          %v507 = vpop.f32.mrf.mxu0
          %v508 = vadd.f32 0.0, %v507
          %v509 = vpop.f32.mrf.mxu0
          %510 = vmatprep.mubr.f32.mxu0 0.0
          %511 = vmatmul.mubr.f32.gmra.mxu0 %v433
          %v512 = vpop.f32.mrf.mxu0
          %v513 = vadd.f32 0.0, %v512
          %v514 = vpop.f32.mrf.mxu0
          %515 = vdwg.mxu0
          %v516 = vld [vmem:[%s399] sm:$0xff]
          %v517 = vld [vmem:[%s399 + $0x8] sm:$0xff]
          %518 = vset.pattern.permute.xlu0 0
          %519 = vperm.xlu0 %518, %v516
          %v520 = vpop.permute.xlu0 %519
          %521 = vset.pattern.permute.xlu0 0
          %522 = vperm.xlu0 %521, %v517
          %v523 = vpop.permute.xlu0 %522
          %vm524 = vcmp.gt.s32.totalorder %v421, %v520
          %vm525 = vcmp.gt.s32.totalorder %v421, %v523
          %v526 = vsel %vm524, -inf, %v508
          %v527 = vsel %vm525, -inf, %v513
          %v528 = vld [vmem:[#allocation2] sm:$0xff]
          %v529 = vld [vmem:[#allocation2 + $0x8] sm:$0xff]
          %vm530 = vcmask 130048
          %v531 = vsel %vm530, %v526, -inf
          %532 = vmax.xlane.f32.xlu0 %v531
          %v533 = vpop.xlane.xlu0 %532
          %v534 = vsel %vm530, %v527, -inf
          %535 = vmax.xlane.f32.xlu0 %v534
          %v536 = vpop.xlane.xlu0 %535
          %v537 = vmax.f32 %v528, %v533
          %v538 = vmax.f32 %v529, %v536
          %v539 = vsub.f32 %v528, %v537
          %v540 = vsub.f32 %v529, %v538
          %v541 = vmul.f32 %v539, 1.442695
          %v542 = vpow.pop %v541
          %v543 = vmul.f32 %v540, 1.442695
          %v544 = vpow.pop %v543
          %546 = vset.pattern.permute.xlu0 0
          %547 = vperm.xlu0 %546, %v537
          %v548 = vpop.permute.xlu0 %547
          %551 = vset.pattern.permute.xlu0 0
          %552 = vperm.xlu0 %551, %v538
          %v553 = vpop.permute.xlu0 %552
          %v555 = vsub.f32 %v526, %v548
          %v556 = vsub.f32 %v527, %v553
          %v557 = vmul.f32 %v555, 1.442695
          %v558 = vpow.pop %v557
          %v559 = vmul.f32 %v556, 1.442695
          %v560 = vpow.pop %v559
          %v561 = vld [vmem:[#allocation3] sm:$0xff]
          %v562 = vld [vmem:[#allocation3 + $0x8] sm:$0xff]
          %v563 = vmul.f32 %v542, %v561
          %v564 = vmul.f32 %v544, %v562
          %v565 = vsel %vm530, %v558, 0.0
          %566 = vadd.xlane.f32.xlu0 %v565
          %v567 = vpop.xlane.xlu0 %566
          %v568 = vsel %vm530, %v560, 0.0
          %569 = vadd.xlane.f32.xlu0 %v568
          %v570 = vpop.xlane.xlu0 %569
          %v571 = vadd.f32 %v563, %v567
          %v572 = vadd.f32 %v564, %v570
          %vm573 = vcmask 7168
          %574 = vst.msk [vmem:[#allocation3] sm:$0xff] %vm573, %v571
          %575 = vst.msk [vmem:[#allocation3 + $0x8] sm:$0xff] %vm573, %v572
          %v576 = vld [vmem:[#allocation4] sm:$0xff]
          %v577 = vld [vmem:[#allocation4 + $0x8] sm:$0xff]
          %579 = vset.pattern.permute.xlu0 0
          %580 = vperm.xlu0 %579, %v542
          %v581 = vpop.permute.xlu0 %580
          %584 = vset.pattern.permute.xlu0 0
          %585 = vperm.xlu0 %584, %v544
          %v586 = vpop.permute.xlu0 %585
          %v588 = vmul.f32 %v581, %v576
          %v589 = vmul.f32 %v586, %v577
          %v591 = vsel %vm530, %v558, 0
          %v594 = vsel %vm530, %v560, 0
          %596 = vmatprep.subr.mxu0 0.0
          %597 = vmatpush1.msra.mxu0 0.0
          %598 = vmatprep.subr.mxu0 0.0
          %599 = vmatpush1.msra.mxu0 0.0
          %600 = vmatprep.subr.mxu0 0.0
          %601 = vmatpush1.msra.mxu0 0.0
          %602 = vmatprep.subr.mxu0 0.0
          %603 = vmatpush1.msra.mxu0 0.0
          %604 = vmatprep.subr.mxu0 0.0
          %605 = vmatpush1.msra.mxu0 0.0
          %606 = vmatprep.subr.mxu0 0.0
          %607 = vmatpush1.msra.mxu0 0.0
          %608 = vmatprep.subr.mxu0 0.0
          %609 = vmatpush1.msra.mxu0 0.0
          %610 = vmatprep.subr.mxu0 0.0
          %611 = vmatpush1.msra.mxu0 0.0
          %612 = vmatprep.subr.mxu0 0.0
          %613 = vmatpush1.msra.mxu0 0.0
          %614 = vmatprep.subr.mxu0 0.0
          %615 = vmatpush1.msra.mxu0 0.0
          %616 = vmatprep.subr.mxu0 0.0
          %617 = vmatpush1.msra.mxu0 0.0
          %618 = vmatprep.subr.mxu0 0.0
          %619 = vmatpush1.msra.mxu0 0.0
          %620 = vmatprep.subr.mxu0 0.0
          %621 = vmatpush1.msra.mxu0 0.0
          %622 = vmatprep.subr.mxu0 0.0
          %623 = vmatpush1.msra.mxu0 0.0
          %624 = vmatprep.subr.mxu0 0.0
          %625 = vmatpush1.msra.mxu0 %v427
          %626 = vmatprep.subr.mxu0 0.0
          %627 = vmatpush1.msra.mxu0 %v426
          %628 = vmatprep.subr.mxu0 0.0
          %629 = vmatpush2.msra.mxu0 0.0
          %630 = vmatprep.subr.mxu0 0.0
          %631 = vmatpush2.msra.mxu0 0.0
          %632 = vmatprep.subr.mxu0 0.0
          %633 = vmatpush2.msra.mxu0 0.0
          %634 = vmatprep.subr.mxu0 0.0
          %635 = vmatpush2.msra.mxu0 0.0
          %636 = vmatprep.subr.mxu0 0.0
          %637 = vmatpush2.msra.mxu0 0.0
          %638 = vmatprep.subr.mxu0 0.0
          %639 = vmatpush2.msra.mxu0 0.0
          %640 = vmatprep.subr.mxu0 0.0
          %641 = vmatpush2.msra.mxu0 0.0
          %642 = vmatprep.subr.mxu0 0.0
          %643 = vmatpush2.msra.mxu0 0.0
          %644 = vmatprep.subr.mxu0 0.0
          %645 = vmatpush2.msra.mxu0 0.0
          %646 = vmatprep.subr.mxu0 0.0
          %647 = vmatpush2.msra.mxu0 0.0
          %648 = vmatprep.subr.mxu0 0.0
          %649 = vmatpush2.msra.mxu0 0.0
          %650 = vmatprep.subr.mxu0 0.0
          %651 = vmatpush2.msra.mxu0 0.0
          %652 = vmatprep.subr.mxu0 0.0
          %653 = vmatpush2.msra.mxu0 0.0
          %654 = vmatprep.subr.mxu0 0.0
          %655 = vmatpush2.msra.mxu0 0.0
          %656 = vmatprep.subr.mxu0 0.0
          %657 = vmatpush2.msra.mxu0 0.0
          %658 = vmatprep.subr.mxu0 0.0
          %659 = vmatpush2.msra.mxu0 0.0
          %660 = vmatprep.mubr.f32.mxu0 0.0
          %661 = vmatmul.mubr.f32.gmra.mxu0 %v591
          %v662 = vpop.f32.mrf.mxu0
          %v663 = vadd.f32 0.0, %v662
          %v664 = vpop.f32.mrf.mxu0
          %665 = vmatprep.mubr.f32.mxu0 0.0
          %666 = vmatmul.mubr.f32.gmra.mxu0 %v594
          %v667 = vpop.f32.mrf.mxu0
          %v668 = vadd.f32 0.0, %v667
          %v669 = vpop.f32.mrf.mxu0
          %670 = vdwg.mxu0
          %v671 = vadd.f32 %v588, %v663
          %v672 = vadd.f32 %v589, %v668
          %673 = vst.msk [vmem:[#allocation4] sm:$0xff] %vm428, %v671
          %674 = vst.msk [vmem:[#allocation4 + $0x8] sm:$0xff] %vm428, %v672
          %675 = vst.msk [vmem:[#allocation2] sm:$0xff] %vm573, %v537
          %676 = vst.msk [vmem:[#allocation2 + $0x8] sm:$0xff] %vm573, %v538
          %v677 = vld [vmem:[%s380] sm:$0xff]
          %v678 = vld [vmem:[%s380 + $0x8] sm:$0xff]
          %v679 = vld [vmem:[%s315] sm:$0xff]
          %v680 = vld [vmem:[%s315 + $0x8] sm:$0xff]
          %v681 = vld [vmem:[%s324] sm:$0xff]
          %v682 = vld [vmem:[%s324 + $0x8] sm:$0xff]
          %685 = vrot.lane.b32.xlu0 %v677, 96
          %v686 = vpop.permute.xlu0 %685
          %687 = vrot.lane.b32.xlu0 %v678, 96
          %v688 = vpop.permute.xlu0 %687
          %691 = vrot.lane.b32.xlu0 %v679, 96
          %v692 = vpop.permute.xlu0 %691
          %693 = vrot.lane.b32.xlu0 %v680, 96
          %v694 = vpop.permute.xlu0 %693
          %v695 = vsel %vm428, %v686, 0
          %v697 = vsel %vm428, %v688, 0
          %v699 = vsel %vm428, %v692, 0
          %v701 = vsel %vm428, %v694, 0
          %703 = vmatprep.subr.mxu0 0.0
          %704 = vmatpush1.xpose.msra.mxu0 0.0
          %705 = vmatprep.subr.mxu0 0.0
          %706 = vmatpush1.xpose.msra.mxu0 0.0
          %707 = vmatprep.subr.mxu0 0.0
          %708 = vmatpush1.xpose.msra.mxu0 0.0
          %709 = vmatprep.subr.mxu0 0.0
          %710 = vmatpush1.xpose.msra.mxu0 0.0
          %711 = vmatprep.subr.mxu0 0.0
          %712 = vmatpush1.xpose.msra.mxu0 0.0
          %713 = vmatprep.subr.mxu0 0.0
          %714 = vmatpush1.xpose.msra.mxu0 0.0
          %715 = vmatprep.subr.mxu0 0.0
          %716 = vmatpush1.xpose.msra.mxu0 0.0
          %717 = vmatprep.subr.mxu0 0.0
          %718 = vmatpush1.xpose.msra.mxu0 0.0
          %719 = vmatprep.subr.mxu0 0.0
          %720 = vmatpush1.xpose.msra.mxu0 0.0
          %721 = vmatprep.subr.mxu0 0.0
          %722 = vmatpush1.xpose.msra.mxu0 0.0
          %723 = vmatprep.subr.mxu0 0.0
          %724 = vmatpush1.xpose.msra.mxu0 0.0
          %725 = vmatprep.subr.mxu0 0.0
          %726 = vmatpush1.xpose.msra.mxu0 0.0
          %727 = vmatprep.subr.mxu0 0.0
          %728 = vmatpush1.xpose.msra.mxu0 0.0
          %729 = vmatprep.subr.mxu0 0.0
          %730 = vmatpush1.xpose.msra.mxu0 0.0
          %731 = vmatprep.subr.mxu0 0.0
          %732 = vmatpush1.xpose.msra.mxu0 %v701
          %733 = vmatprep.subr.mxu0 0.0
          %734 = vmatpush1.xpose.msra.mxu0 %v699
          %735 = vmatprep.subr.mxu0 0.0
          %736 = vmatpush2.xpose.msra.mxu0 0.0
          %737 = vmatprep.subr.mxu0 0.0
          %738 = vmatpush2.xpose.msra.mxu0 0.0
          %739 = vmatprep.subr.mxu0 0.0
          %740 = vmatpush2.xpose.msra.mxu0 0.0
          %741 = vmatprep.subr.mxu0 0.0
          %742 = vmatpush2.xpose.msra.mxu0 0.0
          %743 = vmatprep.subr.mxu0 0.0
          %744 = vmatpush2.xpose.msra.mxu0 0.0
          %745 = vmatprep.subr.mxu0 0.0
          %746 = vmatpush2.xpose.msra.mxu0 0.0
          %747 = vmatprep.subr.mxu0 0.0
          %748 = vmatpush2.xpose.msra.mxu0 0.0
          %749 = vmatprep.subr.mxu0 0.0
          %750 = vmatpush2.xpose.msra.mxu0 0.0
          %751 = vmatprep.subr.mxu0 0.0
          %752 = vmatpush2.xpose.msra.mxu0 0.0
          %753 = vmatprep.subr.mxu0 0.0
          %754 = vmatpush2.xpose.msra.mxu0 0.0
          %755 = vmatprep.subr.mxu0 0.0
          %756 = vmatpush2.xpose.msra.mxu0 0.0
          %757 = vmatprep.subr.mxu0 0.0
          %758 = vmatpush2.xpose.msra.mxu0 0.0
          %759 = vmatprep.subr.mxu0 0.0
          %760 = vmatpush2.xpose.msra.mxu0 0.0
          %761 = vmatprep.subr.mxu0 0.0
          %762 = vmatpush2.xpose.msra.mxu0 0.0
          %763 = vmatprep.subr.mxu0 0.0
          %764 = vmatpush2.xpose.msra.mxu0 0.0
          %765 = vmatprep.subr.mxu0 0.0
          %766 = vmatpush2.xpose.msra.mxu0 0.0
          %767 = vmatprep.mubr.f32.mxu0 0.0
          %768 = vmatmul.mubr.f32.gmra.mxu0 %v695
          %v769 = vpop.f32.mrf.mxu0
          %v770 = vadd.f32 0.0, %v769
          %v771 = vpop.f32.mrf.mxu0
          %772 = vmatprep.mubr.f32.mxu0 0.0
          %773 = vmatmul.mubr.f32.gmra.mxu0 %v697
          %v774 = vpop.f32.mrf.mxu0
          %v775 = vadd.f32 0.0, %v774
          %v776 = vpop.f32.mrf.mxu0
          %777 = vdwg.mxu0
          %v778 = vld [vmem:[%s399] sm:$0xff]
          %v779 = vld [vmem:[%s399 + $0x8] sm:$0xff]
          %780 = vset.pattern.permute.xlu0 1
          %781 = vperm.xlu0 %780, %v778
          %v782 = vpop.permute.xlu0 %781
          %783 = vset.pattern.permute.xlu0 1
          %784 = vperm.xlu0 %783, %v779
          %v785 = vpop.permute.xlu0 %784
          %vm786 = vcmp.gt.s32.totalorder %v421, %v782
          %vm787 = vcmp.gt.s32.totalorder %v421, %v785
          %v788 = vsel %vm786, -inf, %v770
          %v789 = vsel %vm787, -inf, %v775
          %v790 = vld [vmem:[#allocation2] sm:$0xff]
          %v791 = vld [vmem:[#allocation2 + $0x8] sm:$0xff]
          %v792 = vsel %vm530, %v788, -inf
          %793 = vmax.xlane.f32.xlu0 %v792
          %v794 = vpop.xlane.xlu0 %793
          %v795 = vsel %vm530, %v789, -inf
          %796 = vmax.xlane.f32.xlu0 %v795
          %v797 = vpop.xlane.xlu0 %796
          %v798 = vmax.f32 %v790, %v794
          %v799 = vmax.f32 %v791, %v797
          %v800 = vsub.f32 %v790, %v798
          %v801 = vsub.f32 %v791, %v799
          %v802 = vmul.f32 %v800, 1.442695
          %v803 = vpow.pop %v802
          %v804 = vmul.f32 %v801, 1.442695
          %v805 = vpow.pop %v804
          %807 = vset.pattern.permute.xlu0 1
          %808 = vperm.xlu0 %807, %v798
          %v809 = vpop.permute.xlu0 %808
          %812 = vset.pattern.permute.xlu0 1
          %813 = vperm.xlu0 %812, %v799
          %v814 = vpop.permute.xlu0 %813
          %v816 = vsub.f32 %v788, %v809
          %v817 = vsub.f32 %v789, %v814
          %v818 = vmul.f32 %v816, 1.442695
          %v819 = vpow.pop %v818
          %v820 = vmul.f32 %v817, 1.442695
          %v821 = vpow.pop %v820
          %v822 = vld [vmem:[#allocation3] sm:$0xff]
          %v823 = vld [vmem:[#allocation3 + $0x8] sm:$0xff]
          %v824 = vmul.f32 %v803, %v822
          %v825 = vmul.f32 %v805, %v823
          %v826 = vsel %vm530, %v819, 0.0
          %827 = vadd.xlane.f32.xlu0 %v826
          %v828 = vpop.xlane.xlu0 %827
          %v829 = vsel %vm530, %v821, 0.0
          %830 = vadd.xlane.f32.xlu0 %v829
          %v831 = vpop.xlane.xlu0 %830
          %v832 = vadd.f32 %v824, %v828
          %v833 = vadd.f32 %v825, %v831
          %vm834 = vcmask 15368
          %835 = vst.msk [vmem:[#allocation3] sm:$0xff] %vm834, %v832
          %836 = vst.msk [vmem:[#allocation3 + $0x8] sm:$0xff] %vm834, %v833
          %v837 = vld [vmem:[#allocation4] sm:$0xff]
          %v838 = vld [vmem:[#allocation4 + $0x8] sm:$0xff]
          %840 = vset.pattern.permute.xlu0 1
          %841 = vperm.xlu0 %840, %v803
          %v842 = vpop.permute.xlu0 %841
          %845 = vset.pattern.permute.xlu0 1
          %846 = vperm.xlu0 %845, %v805
          %v847 = vpop.permute.xlu0 %846
          %v849 = vmul.f32 %v842, %v837
          %v850 = vmul.f32 %v847, %v838
          %853 = vrot.lane.b32.xlu0 %v681, 96
          %v854 = vpop.permute.xlu0 %853
          %855 = vrot.lane.b32.xlu0 %v682, 96
          %v856 = vpop.permute.xlu0 %855
          %v860 = vsel %vm530, %v819, 0
          %v863 = vsel %vm530, %v821, 0
          %865 = vmatprep.subr.mxu0 0.0
          %866 = vmatpush1.msra.mxu0 0.0
          %867 = vmatprep.subr.mxu0 0.0
          %868 = vmatpush1.msra.mxu0 0.0
          %869 = vmatprep.subr.mxu0 0.0
          %870 = vmatpush1.msra.mxu0 0.0
          %871 = vmatprep.subr.mxu0 0.0
          %872 = vmatpush1.msra.mxu0 0.0
          %873 = vmatprep.subr.mxu0 0.0
          %874 = vmatpush1.msra.mxu0 0.0
          %875 = vmatprep.subr.mxu0 0.0
          %876 = vmatpush1.msra.mxu0 0.0
          %877 = vmatprep.subr.mxu0 0.0
          %878 = vmatpush1.msra.mxu0 0.0
          %879 = vmatprep.subr.mxu0 0.0
          %880 = vmatpush1.msra.mxu0 0.0
          %881 = vmatprep.subr.mxu0 0.0
          %882 = vmatpush1.msra.mxu0 0.0
          %883 = vmatprep.subr.mxu0 0.0
          %884 = vmatpush1.msra.mxu0 0.0
          %885 = vmatprep.subr.mxu0 0.0
          %886 = vmatpush1.msra.mxu0 0.0
          %887 = vmatprep.subr.mxu0 0.0
          %888 = vmatpush1.msra.mxu0 0.0
          %889 = vmatprep.subr.mxu0 0.0
          %890 = vmatpush1.msra.mxu0 0.0
          %891 = vmatprep.subr.mxu0 0.0
          %892 = vmatpush1.msra.mxu0 0.0
          %893 = vmatprep.subr.mxu0 0.0
          %894 = vmatpush1.msra.mxu0 %v856
          %895 = vmatprep.subr.mxu0 0.0
          %896 = vmatpush1.msra.mxu0 %v854
          %897 = vmatprep.subr.mxu0 0.0
          %898 = vmatpush2.msra.mxu0 0.0
          %899 = vmatprep.subr.mxu0 0.0
          %900 = vmatpush2.msra.mxu0 0.0
          %901 = vmatprep.subr.mxu0 0.0
          %902 = vmatpush2.msra.mxu0 0.0
          %903 = vmatprep.subr.mxu0 0.0
          %904 = vmatpush2.msra.mxu0 0.0
          %905 = vmatprep.subr.mxu0 0.0
          %906 = vmatpush2.msra.mxu0 0.0
          %907 = vmatprep.subr.mxu0 0.0
          %908 = vmatpush2.msra.mxu0 0.0
          %909 = vmatprep.subr.mxu0 0.0
          %910 = vmatpush2.msra.mxu0 0.0
          %911 = vmatprep.subr.mxu0 0.0
          %912 = vmatpush2.msra.mxu0 0.0
          %913 = vmatprep.subr.mxu0 0.0
          %914 = vmatpush2.msra.mxu0 0.0
          %915 = vmatprep.subr.mxu0 0.0
          %916 = vmatpush2.msra.mxu0 0.0
          %917 = vmatprep.subr.mxu0 0.0
          %918 = vmatpush2.msra.mxu0 0.0
          %919 = vmatprep.subr.mxu0 0.0
          %920 = vmatpush2.msra.mxu0 0.0
          %921 = vmatprep.subr.mxu0 0.0
          %922 = vmatpush2.msra.mxu0 0.0
          %923 = vmatprep.subr.mxu0 0.0
          %924 = vmatpush2.msra.mxu0 0.0
          %925 = vmatprep.subr.mxu0 0.0
          %926 = vmatpush2.msra.mxu0 0.0
          %927 = vmatprep.subr.mxu0 0.0
          %928 = vmatpush2.msra.mxu0 0.0
          %929 = vmatprep.mubr.f32.mxu0 0.0
          %930 = vmatmul.mubr.f32.gmra.mxu0 %v860
          %v931 = vpop.f32.mrf.mxu0
          %v932 = vadd.f32 0.0, %v931
          %v933 = vpop.f32.mrf.mxu0
          %934 = vmatprep.mubr.f32.mxu0 0.0
          %935 = vmatmul.mubr.f32.gmra.mxu0 %v863
          %v936 = vpop.f32.mrf.mxu0
          %v937 = vadd.f32 0.0, %v936
          %v938 = vpop.f32.mrf.mxu0
          %939 = vdwg.mxu0
          %942 = vrot.lane.b32.xlu0 %v932, 32
          %v943 = vpop.permute.xlu0 %942
          %944 = vrot.lane.b32.xlu0 %v937, 32
          %v945 = vpop.permute.xlu0 %944
          %v948 = vadd.f32 %v849, %v943
          %v949 = vadd.f32 %v850, %v945
          %vm950 = vcmask 523520
          %951 = vst.msk [vmem:[#allocation4] sm:$0xff] %vm950, %v948
          %952 = vst.msk [vmem:[#allocation4 + $0x8] sm:$0xff] %vm950, %v949
          %953 = vst.msk [vmem:[#allocation2] sm:$0xff] %vm834, %v798
          %954 = vst.msk [vmem:[#allocation2 + $0x8] sm:$0xff] %vm834, %v799
          %v955 = vld [vmem:[%s380] sm:$0xff]
          %v956 = vld [vmem:[%s380 + $0x8] sm:$0xff]
          %v957 = vld [vmem:[%s315] sm:$0xff]
          %v958 = vld [vmem:[%s315 + $0x8] sm:$0xff]
          %v959 = vld [vmem:[%s324] sm:$0xff]
          %v960 = vld [vmem:[%s324 + $0x8] sm:$0xff]
          %963 = vrot.lane.b32.xlu0 %v955, 64
          %v964 = vpop.permute.xlu0 %963
          %965 = vrot.lane.b32.xlu0 %v956, 64
          %v966 = vpop.permute.xlu0 %965
          %969 = vrot.lane.b32.xlu0 %v957, 64
          %v970 = vpop.permute.xlu0 %969
          %971 = vrot.lane.b32.xlu0 %v958, 64
          %v972 = vpop.permute.xlu0 %971
          %v973 = vsel %vm428, %v964, 0
          %v975 = vsel %vm428, %v966, 0
          %v977 = vsel %vm428, %v970, 0
          %v979 = vsel %vm428, %v972, 0
          %981 = vmatprep.subr.mxu0 0.0
          %982 = vmatpush1.xpose.msra.mxu0 0.0
          %983 = vmatprep.subr.mxu0 0.0
          %984 = vmatpush1.xpose.msra.mxu0 0.0
          %985 = vmatprep.subr.mxu0 0.0
          %986 = vmatpush1.xpose.msra.mxu0 0.0
          %987 = vmatprep.subr.mxu0 0.0
          %988 = vmatpush1.xpose.msra.mxu0 0.0
          %989 = vmatprep.subr.mxu0 0.0
          %990 = vmatpush1.xpose.msra.mxu0 0.0
          %991 = vmatprep.subr.mxu0 0.0
          %992 = vmatpush1.xpose.msra.mxu0 0.0
          %993 = vmatprep.subr.mxu0 0.0
          %994 = vmatpush1.xpose.msra.mxu0 0.0
          %995 = vmatprep.subr.mxu0 0.0
          %996 = vmatpush1.xpose.msra.mxu0 0.0
          %997 = vmatprep.subr.mxu0 0.0
          %998 = vmatpush1.xpose.msra.mxu0 0.0
          %999 = vmatprep.subr.mxu0 0.0
          %1000 = vmatpush1.xpose.msra.mxu0 0.0
          %1001 = vmatprep.subr.mxu0 0.0
          %1002 = vmatpush1.xpose.msra.mxu0 0.0
          %1003 = vmatprep.subr.mxu0 0.0
          %1004 = vmatpush1.xpose.msra.mxu0 0.0
          %1005 = vmatprep.subr.mxu0 0.0
          %1006 = vmatpush1.xpose.msra.mxu0 0.0
          %1007 = vmatprep.subr.mxu0 0.0
          %1008 = vmatpush1.xpose.msra.mxu0 0.0
          %1009 = vmatprep.subr.mxu0 0.0
          %1010 = vmatpush1.xpose.msra.mxu0 %v979
          %1011 = vmatprep.subr.mxu0 0.0
          %1012 = vmatpush1.xpose.msra.mxu0 %v977
          %1013 = vmatprep.subr.mxu0 0.0
          %1014 = vmatpush2.xpose.msra.mxu0 0.0
          %1015 = vmatprep.subr.mxu0 0.0
          %1016 = vmatpush2.xpose.msra.mxu0 0.0
          %1017 = vmatprep.subr.mxu0 0.0
          %1018 = vmatpush2.xpose.msra.mxu0 0.0
          %1019 = vmatprep.subr.mxu0 0.0
          %1020 = vmatpush2.xpose.msra.mxu0 0.0
          %1021 = vmatprep.subr.mxu0 0.0
          %1022 = vmatpush2.xpose.msra.mxu0 0.0
          %1023 = vmatprep.subr.mxu0 0.0
          %1024 = vmatpush2.xpose.msra.mxu0 0.0
          %1025 = vmatprep.subr.mxu0 0.0
          %1026 = vmatpush2.xpose.msra.mxu0 0.0
          %1027 = vmatprep.subr.mxu0 0.0
          %1028 = vmatpush2.xpose.msra.mxu0 0.0
          %1029 = vmatprep.subr.mxu0 0.0
          %1030 = vmatpush2.xpose.msra.mxu0 0.0
          %1031 = vmatprep.subr.mxu0 0.0
          %1032 = vmatpush2.xpose.msra.mxu0 0.0
          %1033 = vmatprep.subr.mxu0 0.0
          %1034 = vmatpush2.xpose.msra.mxu0 0.0
          %1035 = vmatprep.subr.mxu0 0.0
          %1036 = vmatpush2.xpose.msra.mxu0 0.0
          %1037 = vmatprep.subr.mxu0 0.0
          %1038 = vmatpush2.xpose.msra.mxu0 0.0
          %1039 = vmatprep.subr.mxu0 0.0
          %1040 = vmatpush2.xpose.msra.mxu0 0.0
          %1041 = vmatprep.subr.mxu0 0.0
          %1042 = vmatpush2.xpose.msra.mxu0 0.0
          %1043 = vmatprep.subr.mxu0 0.0
          %1044 = vmatpush2.xpose.msra.mxu0 0.0
          %1045 = vmatprep.mubr.f32.mxu0 0.0
          %1046 = vmatmul.mubr.f32.gmra.mxu0 %v973
          %v1047 = vpop.f32.mrf.mxu0
          %v1048 = vadd.f32 0.0, %v1047
          %v1049 = vpop.f32.mrf.mxu0
          %1050 = vmatprep.mubr.f32.mxu0 0.0
          %1051 = vmatmul.mubr.f32.gmra.mxu0 %v975
          %v1052 = vpop.f32.mrf.mxu0
          %v1053 = vadd.f32 0.0, %v1052
          %v1054 = vpop.f32.mrf.mxu0
          %1055 = vdwg.mxu0
          %v1056 = vld [vmem:[%s399] sm:$0xff]
          %v1057 = vld [vmem:[%s399 + $0x8] sm:$0xff]
          %1058 = vset.pattern.permute.xlu0 2
          %1059 = vperm.xlu0 %1058, %v1056
          %v1060 = vpop.permute.xlu0 %1059
          %1061 = vset.pattern.permute.xlu0 2
          %1062 = vperm.xlu0 %1061, %v1057
          %v1063 = vpop.permute.xlu0 %1062
          %vm1064 = vcmp.gt.s32.totalorder %v421, %v1060
          %vm1065 = vcmp.gt.s32.totalorder %v421, %v1063
          %v1066 = vsel %vm1064, -inf, %v1048
          %v1067 = vsel %vm1065, -inf, %v1053
          %v1068 = vld [vmem:[#allocation2] sm:$0xff]
          %v1069 = vld [vmem:[#allocation2 + $0x8] sm:$0xff]
          %v1070 = vsel %vm530, %v1066, -inf
          %1071 = vmax.xlane.f32.xlu0 %v1070
          %v1072 = vpop.xlane.xlu0 %1071
          %v1073 = vsel %vm530, %v1067, -inf
          %1074 = vmax.xlane.f32.xlu0 %v1073
          %v1075 = vpop.xlane.xlu0 %1074
          %v1076 = vmax.f32 %v1068, %v1072
          %v1077 = vmax.f32 %v1069, %v1075
          %v1078 = vsub.f32 %v1068, %v1076
          %v1079 = vsub.f32 %v1069, %v1077
          %v1080 = vmul.f32 %v1078, 1.442695
          %v1081 = vpow.pop %v1080
          %v1082 = vmul.f32 %v1079, 1.442695
          %v1083 = vpow.pop %v1082
          %1085 = vset.pattern.permute.xlu0 2
          %1086 = vperm.xlu0 %1085, %v1076
          %v1087 = vpop.permute.xlu0 %1086
          %1090 = vset.pattern.permute.xlu0 2
          %1091 = vperm.xlu0 %1090, %v1077
          %v1092 = vpop.permute.xlu0 %1091
          %v1094 = vsub.f32 %v1066, %v1087
          %v1095 = vsub.f32 %v1067, %v1092
          %v1096 = vmul.f32 %v1094, 1.442695
          %v1097 = vpow.pop %v1096
          %v1098 = vmul.f32 %v1095, 1.442695
          %v1099 = vpow.pop %v1098
          %v1100 = vld [vmem:[#allocation3] sm:$0xff]
          %v1101 = vld [vmem:[#allocation3 + $0x8] sm:$0xff]
          %v1102 = vmul.f32 %v1081, %v1100
          %v1103 = vmul.f32 %v1083, %v1101
          %v1104 = vsel %vm530, %v1097, 0.0
          %1105 = vadd.xlane.f32.xlu0 %v1104
          %v1106 = vpop.xlane.xlu0 %1105
          %v1107 = vsel %vm530, %v1099, 0.0
          %1108 = vadd.xlane.f32.xlu0 %v1107
          %v1109 = vpop.xlane.xlu0 %1108
          %v1110 = vadd.f32 %v1102, %v1106
          %v1111 = vadd.f32 %v1103, %v1109
          %vm1112 = vcmask 23568
          %1113 = vst.msk [vmem:[#allocation3] sm:$0xff] %vm1112, %v1110
          %1114 = vst.msk [vmem:[#allocation3 + $0x8] sm:$0xff] %vm1112, %v1111
          %v1115 = vld [vmem:[#allocation4] sm:$0xff]
          %v1116 = vld [vmem:[#allocation4 + $0x8] sm:$0xff]
          %1118 = vset.pattern.permute.xlu0 2
          %1119 = vperm.xlu0 %1118, %v1081
          %v1120 = vpop.permute.xlu0 %1119
          %1123 = vset.pattern.permute.xlu0 2
          %1124 = vperm.xlu0 %1123, %v1083
          %v1125 = vpop.permute.xlu0 %1124
          %v1127 = vmul.f32 %v1120, %v1115
          %v1128 = vmul.f32 %v1125, %v1116
          %1131 = vrot.lane.b32.xlu0 %v959, 64
          %v1132 = vpop.permute.xlu0 %1131
          %1133 = vrot.lane.b32.xlu0 %v960, 64
          %v1134 = vpop.permute.xlu0 %1133
          %v1138 = vsel %vm530, %v1097, 0
          %v1141 = vsel %vm530, %v1099, 0
          %1143 = vmatprep.subr.mxu0 0.0
          %1144 = vmatpush1.msra.mxu0 0.0
          %1145 = vmatprep.subr.mxu0 0.0
          %1146 = vmatpush1.msra.mxu0 0.0
          %1147 = vmatprep.subr.mxu0 0.0
          %1148 = vmatpush1.msra.mxu0 0.0
          %1149 = vmatprep.subr.mxu0 0.0
          %1150 = vmatpush1.msra.mxu0 0.0
          %1151 = vmatprep.subr.mxu0 0.0
          %1152 = vmatpush1.msra.mxu0 0.0
          %1153 = vmatprep.subr.mxu0 0.0
          %1154 = vmatpush1.msra.mxu0 0.0
          %1155 = vmatprep.subr.mxu0 0.0
          %1156 = vmatpush1.msra.mxu0 0.0
          %1157 = vmatprep.subr.mxu0 0.0
          %1158 = vmatpush1.msra.mxu0 0.0
          %1159 = vmatprep.subr.mxu0 0.0
          %1160 = vmatpush1.msra.mxu0 0.0
          %1161 = vmatprep.subr.mxu0 0.0
          %1162 = vmatpush1.msra.mxu0 0.0
          %1163 = vmatprep.subr.mxu0 0.0
          %1164 = vmatpush1.msra.mxu0 0.0
          %1165 = vmatprep.subr.mxu0 0.0
          %1166 = vmatpush1.msra.mxu0 0.0
          %1167 = vmatprep.subr.mxu0 0.0
          %1168 = vmatpush1.msra.mxu0 0.0
          %1169 = vmatprep.subr.mxu0 0.0
          %1170 = vmatpush1.msra.mxu0 0.0
          %1171 = vmatprep.subr.mxu0 0.0
          %1172 = vmatpush1.msra.mxu0 %v1134
          %1173 = vmatprep.subr.mxu0 0.0
          %1174 = vmatpush1.msra.mxu0 %v1132
          %1175 = vmatprep.subr.mxu0 0.0
          %1176 = vmatpush2.msra.mxu0 0.0
          %1177 = vmatprep.subr.mxu0 0.0
          %1178 = vmatpush2.msra.mxu0 0.0
          %1179 = vmatprep.subr.mxu0 0.0
          %1180 = vmatpush2.msra.mxu0 0.0
          %1181 = vmatprep.subr.mxu0 0.0
          %1182 = vmatpush2.msra.mxu0 0.0
          %1183 = vmatprep.subr.mxu0 0.0
          %1184 = vmatpush2.msra.mxu0 0.0
          %1185 = vmatprep.subr.mxu0 0.0
          %1186 = vmatpush2.msra.mxu0 0.0
          %1187 = vmatprep.subr.mxu0 0.0
          %1188 = vmatpush2.msra.mxu0 0.0
          %1189 = vmatprep.subr.mxu0 0.0
          %1190 = vmatpush2.msra.mxu0 0.0
          %1191 = vmatprep.subr.mxu0 0.0
          %1192 = vmatpush2.msra.mxu0 0.0
          %1193 = vmatprep.subr.mxu0 0.0
          %1194 = vmatpush2.msra.mxu0 0.0
          %1195 = vmatprep.subr.mxu0 0.0
          %1196 = vmatpush2.msra.mxu0 0.0
          %1197 = vmatprep.subr.mxu0 0.0
          %1198 = vmatpush2.msra.mxu0 0.0
          %1199 = vmatprep.subr.mxu0 0.0
          %1200 = vmatpush2.msra.mxu0 0.0
          %1201 = vmatprep.subr.mxu0 0.0
          %1202 = vmatpush2.msra.mxu0 0.0
          %1203 = vmatprep.subr.mxu0 0.0
          %1204 = vmatpush2.msra.mxu0 0.0
          %1205 = vmatprep.subr.mxu0 0.0
          %1206 = vmatpush2.msra.mxu0 0.0
          %1207 = vmatprep.mubr.f32.mxu0 0.0
          %1208 = vmatmul.mubr.f32.gmra.mxu0 %v1138
          %v1209 = vpop.f32.mrf.mxu0
          %v1210 = vadd.f32 0.0, %v1209
          %v1211 = vpop.f32.mrf.mxu0
          %1212 = vmatprep.mubr.f32.mxu0 0.0
          %1213 = vmatmul.mubr.f32.gmra.mxu0 %v1141
          %v1214 = vpop.f32.mrf.mxu0
          %v1215 = vadd.f32 0.0, %v1214
          %v1216 = vpop.f32.mrf.mxu0
          %1217 = vdwg.mxu0
          %1220 = vrot.lane.b32.xlu0 %v1210, 64
          %v1221 = vpop.permute.xlu0 %1220
          %1222 = vrot.lane.b32.xlu0 %v1215, 64
          %v1223 = vpop.permute.xlu0 %1222
          %v1226 = vadd.f32 %v1127, %v1221
          %v1227 = vadd.f32 %v1128, %v1223
          %vm1228 = vcmask 785920
          %1229 = vst.msk [vmem:[#allocation4] sm:$0xff] %vm1228, %v1226
          %1230 = vst.msk [vmem:[#allocation4 + $0x8] sm:$0xff] %vm1228, %v1227
          %1231 = vst.msk [vmem:[#allocation2] sm:$0xff] %vm1112, %v1076
          %1232 = vst.msk [vmem:[#allocation2 + $0x8] sm:$0xff] %vm1112, %v1077
          %v1233 = vld [vmem:[%s380] sm:$0xff]
          %v1234 = vld [vmem:[%s380 + $0x8] sm:$0xff]
          %v1235 = vld [vmem:[%s315] sm:$0xff]
          %v1236 = vld [vmem:[%s315 + $0x8] sm:$0xff]
          %v1237 = vld [vmem:[%s324] sm:$0xff]
          %v1238 = vld [vmem:[%s324 + $0x8] sm:$0xff]
          %1241 = vrot.lane.b32.xlu0 %v1233, 32
          %v1242 = vpop.permute.xlu0 %1241
          %1243 = vrot.lane.b32.xlu0 %v1234, 32
          %v1244 = vpop.permute.xlu0 %1243
          %1247 = vrot.lane.b32.xlu0 %v1235, 32
          %v1248 = vpop.permute.xlu0 %1247
          %1249 = vrot.lane.b32.xlu0 %v1236, 32
          %v1250 = vpop.permute.xlu0 %1249
          %v1251 = vsel %vm428, %v1242, 0
          %v1253 = vsel %vm428, %v1244, 0
          %v1255 = vsel %vm428, %v1248, 0
          %v1257 = vsel %vm428, %v1250, 0
          %1259 = vmatprep.subr.mxu0 0.0
          %1260 = vmatpush1.xpose.msra.mxu0 0.0
          %1261 = vmatprep.subr.mxu0 0.0
          %1262 = vmatpush1.xpose.msra.mxu0 0.0
          %1263 = vmatprep.subr.mxu0 0.0
          %1264 = vmatpush1.xpose.msra.mxu0 0.0
          %1265 = vmatprep.subr.mxu0 0.0
          %1266 = vmatpush1.xpose.msra.mxu0 0.0
          %1267 = vmatprep.subr.mxu0 0.0
          %1268 = vmatpush1.xpose.msra.mxu0 0.0
          %1269 = vmatprep.subr.mxu0 0.0
          %1270 = vmatpush1.xpose.msra.mxu0 0.0
          %1271 = vmatprep.subr.mxu0 0.0
          %1272 = vmatpush1.xpose.msra.mxu0 0.0
          %1273 = vmatprep.subr.mxu0 0.0
          %1274 = vmatpush1.xpose.msra.mxu0 0.0
          %1275 = vmatprep.subr.mxu0 0.0
          %1276 = vmatpush1.xpose.msra.mxu0 0.0
          %1277 = vmatprep.subr.mxu0 0.0
          %1278 = vmatpush1.xpose.msra.mxu0 0.0
          %1279 = vmatprep.subr.mxu0 0.0
          %1280 = vmatpush1.xpose.msra.mxu0 0.0
          %1281 = vmatprep.subr.mxu0 0.0
          %1282 = vmatpush1.xpose.msra.mxu0 0.0
          %1283 = vmatprep.subr.mxu0 0.0
          %1284 = vmatpush1.xpose.msra.mxu0 0.0
          %1285 = vmatprep.subr.mxu0 0.0
          %1286 = vmatpush1.xpose.msra.mxu0 0.0
          %1287 = vmatprep.subr.mxu0 0.0
          %1288 = vmatpush1.xpose.msra.mxu0 %v1257
          %1289 = vmatprep.subr.mxu0 0.0
          %1290 = vmatpush1.xpose.msra.mxu0 %v1255
          %1291 = vmatprep.subr.mxu0 0.0
          %1292 = vmatpush2.xpose.msra.mxu0 0.0
          %1293 = vmatprep.subr.mxu0 0.0
          %1294 = vmatpush2.xpose.msra.mxu0 0.0
          %1295 = vmatprep.subr.mxu0 0.0
          %1296 = vmatpush2.xpose.msra.mxu0 0.0
          %1297 = vmatprep.subr.mxu0 0.0
          %1298 = vmatpush2.xpose.msra.mxu0 0.0
          %1299 = vmatprep.subr.mxu0 0.0
          %1300 = vmatpush2.xpose.msra.mxu0 0.0
          %1301 = vmatprep.subr.mxu0 0.0
          %1302 = vmatpush2.xpose.msra.mxu0 0.0
          %1303 = vmatprep.subr.mxu0 0.0
          %1304 = vmatpush2.xpose.msra.mxu0 0.0
          %1305 = vmatprep.subr.mxu0 0.0
          %1306 = vmatpush2.xpose.msra.mxu0 0.0
          %1307 = vmatprep.subr.mxu0 0.0
          %1308 = vmatpush2.xpose.msra.mxu0 0.0
          %1309 = vmatprep.subr.mxu0 0.0
          %1310 = vmatpush2.xpose.msra.mxu0 0.0
          %1311 = vmatprep.subr.mxu0 0.0
          %1312 = vmatpush2.xpose.msra.mxu0 0.0
          %1313 = vmatprep.subr.mxu0 0.0
          %1314 = vmatpush2.xpose.msra.mxu0 0.0
          %1315 = vmatprep.subr.mxu0 0.0
          %1316 = vmatpush2.xpose.msra.mxu0 0.0
          %1317 = vmatprep.subr.mxu0 0.0
          %1318 = vmatpush2.xpose.msra.mxu0 0.0
          %1319 = vmatprep.subr.mxu0 0.0
          %1320 = vmatpush2.xpose.msra.mxu0 0.0
          %1321 = vmatprep.subr.mxu0 0.0
          %1322 = vmatpush2.xpose.msra.mxu0 0.0
          %1323 = vmatprep.mubr.f32.mxu0 0.0
          %1324 = vmatmul.mubr.f32.gmra.mxu0 %v1251
          %v1325 = vpop.f32.mrf.mxu0
          %v1326 = vadd.f32 0.0, %v1325
          %v1327 = vpop.f32.mrf.mxu0
          %1328 = vmatprep.mubr.f32.mxu0 0.0
          %1329 = vmatmul.mubr.f32.gmra.mxu0 %v1253
          %v1330 = vpop.f32.mrf.mxu0
          %v1331 = vadd.f32 0.0, %v1330
          %v1332 = vpop.f32.mrf.mxu0
          %1333 = vdwg.mxu0
          %v1334 = vld [vmem:[%s399] sm:$0xff]
          %v1335 = vld [vmem:[%s399 + $0x8] sm:$0xff]
          %1336 = vset.pattern.permute.xlu0 3
          %1337 = vperm.xlu0 %1336, %v1334
          %v1338 = vpop.permute.xlu0 %1337
          %1339 = vset.pattern.permute.xlu0 3
          %1340 = vperm.xlu0 %1339, %v1335
          %v1341 = vpop.permute.xlu0 %1340
          %vm1342 = vcmp.gt.s32.totalorder %v421, %v1338
          %vm1343 = vcmp.gt.s32.totalorder %v421, %v1341
          %v1344 = vsel %vm1342, -inf, %v1326
          %v1345 = vsel %vm1343, -inf, %v1331
          %v1346 = vld [vmem:[#allocation2] sm:$0xff]
          %v1347 = vld [vmem:[#allocation2 + $0x8] sm:$0xff]
          %v1348 = vsel %vm530, %v1344, -inf
          %1349 = vmax.xlane.f32.xlu0 %v1348
          %v1350 = vpop.xlane.xlu0 %1349
          %v1351 = vsel %vm530, %v1345, -inf
          %1352 = vmax.xlane.f32.xlu0 %v1351
          %v1353 = vpop.xlane.xlu0 %1352
          %v1354 = vmax.f32 %v1346, %v1350
          %v1355 = vmax.f32 %v1347, %v1353
          %v1356 = vsub.f32 %v1346, %v1354
          %v1357 = vsub.f32 %v1347, %v1355
          %v1358 = vmul.f32 %v1356, 1.442695
          %v1359 = vpow.pop %v1358
          %v1360 = vmul.f32 %v1357, 1.442695
          %v1361 = vpow.pop %v1360
          %1363 = vset.pattern.permute.xlu0 3
          %1364 = vperm.xlu0 %1363, %v1354
          %v1365 = vpop.permute.xlu0 %1364
          %1368 = vset.pattern.permute.xlu0 3
          %1369 = vperm.xlu0 %1368, %v1355
          %v1370 = vpop.permute.xlu0 %1369
          %v1372 = vsub.f32 %v1344, %v1365
          %v1373 = vsub.f32 %v1345, %v1370
          %v1374 = vmul.f32 %v1372, 1.442695
          %v1375 = vpow.pop %v1374
          %v1376 = vmul.f32 %v1373, 1.442695
          %v1377 = vpow.pop %v1376
          %v1378 = vld [vmem:[#allocation3] sm:$0xff]
          %v1379 = vld [vmem:[#allocation3 + $0x8] sm:$0xff]
          %v1380 = vmul.f32 %v1359, %v1378
          %v1381 = vmul.f32 %v1361, %v1379
          %v1382 = vsel %vm530, %v1375, 0.0
          %1383 = vadd.xlane.f32.xlu0 %v1382
          %v1384 = vpop.xlane.xlu0 %1383
          %v1385 = vsel %vm530, %v1377, 0.0
          %1386 = vadd.xlane.f32.xlu0 %v1385
          %v1387 = vpop.xlane.xlu0 %1386
          %v1388 = vadd.f32 %v1380, %v1384
          %v1389 = vadd.f32 %v1381, %v1387
          %vm1390 = vcmask 31768
          %1391 = vst.msk [vmem:[#allocation3] sm:$0xff] %vm1390, %v1388
          %1392 = vst.msk [vmem:[#allocation3 + $0x8] sm:$0xff] %vm1390, %v1389
          %v1393 = vld [vmem:[#allocation4] sm:$0xff]
          %v1394 = vld [vmem:[#allocation4 + $0x8] sm:$0xff]
          %1396 = vset.pattern.permute.xlu0 3
          %1397 = vperm.xlu0 %1396, %v1359
          %v1398 = vpop.permute.xlu0 %1397
          %1401 = vset.pattern.permute.xlu0 3
          %1402 = vperm.xlu0 %1401, %v1361
          %v1403 = vpop.permute.xlu0 %1402
          %v1405 = vmul.f32 %v1398, %v1393
          %v1406 = vmul.f32 %v1403, %v1394
          %1409 = vrot.lane.b32.xlu0 %v1237, 32
          %v1410 = vpop.permute.xlu0 %1409
          %1411 = vrot.lane.b32.xlu0 %v1238, 32
          %v1412 = vpop.permute.xlu0 %1411
          %v1416 = vsel %vm530, %v1375, 0
          %v1419 = vsel %vm530, %v1377, 0
          %1421 = vmatprep.subr.mxu0 0.0
          %1422 = vmatpush1.msra.mxu0 0.0
          %1423 = vmatprep.subr.mxu0 0.0
          %1424 = vmatpush1.msra.mxu0 0.0
          %1425 = vmatprep.subr.mxu0 0.0
          %1426 = vmatpush1.msra.mxu0 0.0
          %1427 = vmatprep.subr.mxu0 0.0
          %1428 = vmatpush1.msra.mxu0 0.0
          %1429 = vmatprep.subr.mxu0 0.0
          %1430 = vmatpush1.msra.mxu0 0.0
          %1431 = vmatprep.subr.mxu0 0.0
          %1432 = vmatpush1.msra.mxu0 0.0
          %1433 = vmatprep.subr.mxu0 0.0
          %1434 = vmatpush1.msra.mxu0 0.0
          %1435 = vmatprep.subr.mxu0 0.0
          %1436 = vmatpush1.msra.mxu0 0.0
          %1437 = vmatprep.subr.mxu0 0.0
          %1438 = vmatpush1.msra.mxu0 0.0
          %1439 = vmatprep.subr.mxu0 0.0
          %1440 = vmatpush1.msra.mxu0 0.0
          %1441 = vmatprep.subr.mxu0 0.0
          %1442 = vmatpush1.msra.mxu0 0.0
          %1443 = vmatprep.subr.mxu0 0.0
          %1444 = vmatpush1.msra.mxu0 0.0
          %1445 = vmatprep.subr.mxu0 0.0
          %1446 = vmatpush1.msra.mxu0 0.0
          %1447 = vmatprep.subr.mxu0 0.0
          %1448 = vmatpush1.msra.mxu0 0.0
          %1449 = vmatprep.subr.mxu0 0.0
          %1450 = vmatpush1.msra.mxu0 %v1412
          %1451 = vmatprep.subr.mxu0 0.0
          %1452 = vmatpush1.msra.mxu0 %v1410
          %1453 = vmatprep.subr.mxu0 0.0
          %1454 = vmatpush2.msra.mxu0 0.0
          %1455 = vmatprep.subr.mxu0 0.0
          %1456 = vmatpush2.msra.mxu0 0.0
          %1457 = vmatprep.subr.mxu0 0.0
          %1458 = vmatpush2.msra.mxu0 0.0
          %1459 = vmatprep.subr.mxu0 0.0
          %1460 = vmatpush2.msra.mxu0 0.0
          %1461 = vmatprep.subr.mxu0 0.0
          %1462 = vmatpush2.msra.mxu0 0.0
          %1463 = vmatprep.subr.mxu0 0.0
          %1464 = vmatpush2.msra.mxu0 0.0
          %1465 = vmatprep.subr.mxu0 0.0
          %1466 = vmatpush2.msra.mxu0 0.0
          %1467 = vmatprep.subr.mxu0 0.0
          %1468 = vmatpush2.msra.mxu0 0.0
          %1469 = vmatprep.subr.mxu0 0.0
          %1470 = vmatpush2.msra.mxu0 0.0
          %1471 = vmatprep.subr.mxu0 0.0
          %1472 = vmatpush2.msra.mxu0 0.0
          %1473 = vmatprep.subr.mxu0 0.0
          %1474 = vmatpush2.msra.mxu0 0.0
          %1475 = vmatprep.subr.mxu0 0.0
          %1476 = vmatpush2.msra.mxu0 0.0
          %1477 = vmatprep.subr.mxu0 0.0
          %1478 = vmatpush2.msra.mxu0 0.0
          %1479 = vmatprep.subr.mxu0 0.0
          %1480 = vmatpush2.msra.mxu0 0.0
          %1481 = vmatprep.subr.mxu0 0.0
          %1482 = vmatpush2.msra.mxu0 0.0
          %1483 = vmatprep.subr.mxu0 0.0
          %1484 = vmatpush2.msra.mxu0 0.0
          %1485 = vmatprep.mubr.f32.mxu0 0.0
          %1486 = vmatmul.mubr.f32.gmra.mxu0 %v1416
          %v1487 = vpop.f32.mrf.mxu0
          %v1488 = vadd.f32 0.0, %v1487
          %v1489 = vpop.f32.mrf.mxu0
          %1490 = vmatprep.mubr.f32.mxu0 0.0
          %1491 = vmatmul.mubr.f32.gmra.mxu0 %v1419
          %v1492 = vpop.f32.mrf.mxu0
          %v1493 = vadd.f32 0.0, %v1492
          %v1494 = vpop.f32.mrf.mxu0
          %1495 = vdwg.mxu0
          %1498 = vrot.lane.b32.xlu0 %v1488, 96
          %v1499 = vpop.permute.xlu0 %1498
          %1500 = vrot.lane.b32.xlu0 %v1493, 96
          %v1501 = vpop.permute.xlu0 %1500
          %v1504 = vadd.f32 %v1405, %v1499
          %v1505 = vadd.f32 %v1406, %v1501
          %vm1506 = vcmask 1048320
          %1507 = vst.msk [vmem:[#allocation4] sm:$0xff] %vm1506, %v1504
          %1508 = vst.msk [vmem:[#allocation4 + $0x8] sm:$0xff] %vm1506, %v1505
          %1509 = vst.msk [vmem:[#allocation2] sm:$0xff] %vm1390, %v1354
          %1510 = vst.msk [vmem:[#allocation2 + $0x8] sm:$0xff] %vm1390, %v1355
        $region52: #{tpu_custom_call.1} parent=35 // pred_fallthru
          _
        // Predicated region
        $region53: #{tpu_custom_call.1} parent=35 // pred_check
          %p1511 = pneg %p400
        $region54: #{tpu_custom_call.1} parent=35 // pred_check_branch
          %1513 = sbr.rel (%p1511) target = $region56
        $region55: #{tpu_custom_call.1} parent=35 // pred_region
          %v1514 = vld [vmem:[#allocation3] sm:$0xff]
          %v1515 = vld [vmem:[#allocation3 + $0x8] sm:$0xff]
          %v1516 = vrcp.pop %v1514
          %v1517 = vrcp.pop %v1515
          %v1518 = vld [vmem:[#allocation4] sm:$0xff]
          %v1519 = vld [vmem:[#allocation4 + $0x8] sm:$0xff]
          %1521 = vset.pattern.permute.xlu0 0
          %1522 = vperm.xlu0 %1521, %v1516
          %v1523 = vpop.permute.xlu0 %1522
          %1526 = vset.pattern.permute.xlu0 0
          %1527 = vperm.xlu0 %1526, %v1517
          %v1528 = vpop.permute.xlu0 %1527
          %v1530 = vmul.f32 %v1518, %v1523
          %v1531 = vmul.f32 %v1519, %v1528
          %1532 = vset.pattern.permute.xlu0 1
          %1533 = vperm.xlu0 %1532, %v1516
          %v1534 = vpop.permute.xlu0 %1533
          %1536 = vset.pattern.permute.xlu0 1
          %1537 = vperm.xlu0 %1536, %v1517
          %v1538 = vpop.permute.xlu0 %1537
          %v1540 = vmul.f32 %v1518, %v1534
          %v1541 = vmul.f32 %v1519, %v1538
          %1542 = vset.pattern.permute.xlu0 2
          %1543 = vperm.xlu0 %1542, %v1516
          %v1544 = vpop.permute.xlu0 %1543
          %1546 = vset.pattern.permute.xlu0 2
          %1547 = vperm.xlu0 %1546, %v1517
          %v1548 = vpop.permute.xlu0 %1547
          %v1550 = vmul.f32 %v1518, %v1544
          %v1551 = vmul.f32 %v1519, %v1548
          %1552 = vset.pattern.permute.xlu0 3
          %1553 = vperm.xlu0 %1552, %v1516
          %v1554 = vpop.permute.xlu0 %1553
          %1556 = vset.pattern.permute.xlu0 3
          %1557 = vperm.xlu0 %1556, %v1517
          %v1558 = vpop.permute.xlu0 %1557
          %v1560 = vmul.f32 %v1518, %v1554
          %v1561 = vmul.f32 %v1519, %v1558
          %vm1562 = vcmask 261120
          %v1563 = vsel %vm1562, %v1530, %v1540
          %v1564 = vsel %vm1562, %v1531, %v1541
          %vm1565 = vcmask 523264
          %v1566 = vsel %vm1565, %v1563, %v1550
          %v1567 = vsel %vm1565, %v1564, %v1551
          %vm1568 = vcmask 785408
          %v1569 = vsel %vm1568, %v1566, %v1560
          %v1570 = vsel %vm1568, %v1567, %v1561
          %1571 = vst [vmem:[%s371] sm:$0xff] %v1569
          %1572 = vst [vmem:[%s371 + $0x8] sm:$0xff] %v1570
        $region56: #{tpu_custom_call.1} parent=35 // pred_fallthru
          _
        %s1573 = sand.u32 %s192, 1
        %s1574 = scalar_lea.sflag [#allocation9], %s1573
        %s1575 = sand.u32 %s192, 1
        %s1576 = smul.addr %s1575, 16
        %s1577 = scalar_lea.vmem [#allocation12], %s1576
        // Predicated region
        $region57: #{tpu_custom_call.1} parent=35 // pred_check
          %p1578 = pneg %p202
        $region58: #{tpu_custom_call.1} parent=35 // pred_check_branch
          %1580 = sbr.rel (%p1578) target = $region60
        $region59: #{tpu_custom_call.1} parent=35 // pred_region
          %s1582 = ssub.s32 256, 256
          %1583 = vsyncadd %s1574, %s1582
          %s1584 = smul.addr %s37, 2
          %s1585 = smul.addr %s36, 2
          %s1586 = sadd.s32 %s1584, %s1585
          %s1587 = smul.addr %s1586, 128
          %s1588 = scalar_lea.hbm %s5, %s1587
          %s1589 = sshll.u32 %s1577, 4
          %s1590 = int_to_ptr.vmem [resolvable:$true] %s1589
          %1595 = dma.vmem_to_hbm [thread:$0]  %s1590, 256, %s1588, %s1574, 128, 128, 8
        $region60: #{tpu_custom_call.1} parent=35 // pred_fallthru
          _
      $region36: #{tpu_custom_call.1} parent=5 // pred_fallthru
        _
      %p1596 = scmp.le.s32.totalorder 2, %s26
      // Predicated region
      $region61: #{tpu_custom_call.1} parent=5 // pred_check
        %p1597 = pneg %p1596
      $region62: #{tpu_custom_call.1} parent=5 // pred_check_branch
        %1599 = sbr.rel (%p1597) target = $region64
      $region63: #{tpu_custom_call.1} parent=5 // pred_region
        %s1600 = ssub.s32 %s26, 2
        // Predicated region
        $region65: #{tpu_custom_call.1} parent=63 // pred_check
          %p1601 = pneg %p208
        $region66: #{tpu_custom_call.1} parent=63 // pred_check_branch
          %1603 = sbr.rel (%p1601) target = $region68
        $region67: #{tpu_custom_call.1} parent=63 // pred_region
          %s1604 = sand.u32 %s193, 1
          %s1605 = scalar_lea.sflag [#allocation9], %s1604
          %s1606 = sand.u32 %s193, 1
          %s1607 = smul.addr %s1606, 16
          %s1608 = scalar_lea.vmem [#allocation12], %s1607
          %1609 = dma.done %s1605, 256
        $region68: #{tpu_custom_call.1} parent=63 // pred_fallthru
          _
      $region64: #{tpu_custom_call.1} parent=5 // pred_fallthru
        _
    $region6: #{tpu_custom_call.1} parent=1 // loop_footer
      %s30 = sadd.s32 1, %s26
    $region7: #{tpu_custom_call.1} parent=1 // loop_footer_branch
      %25 = sbr.rel target = $region3
    $region8: #{tpu_custom_call.1} parent=1 // loop_exit
      _
    %1610 = vsyncpa [#allocation8], 1
    %s1611 = scalar_lea.sflag [#allocation8], 1
    %1612 = vsyncpa %s1611, 1
    %1613 = vsyncpa [#allocation11], 1
    %s1614 = scalar_lea.sflag [#allocation11], 1
    %1615 = vsyncpa %s1614, 1
    %1616 = vsyncpa [#allocation9], 1
    %s1617 = scalar_lea.sflag [#allocation9], 1
    %1618 = vsyncpa %s1617, 1

</llo_original>
